<compile_context>
chip_gen: v6e
topology: v6e:2x2x1
jax: 0.10.0
libtpu: 0.0.40
codegen_flags: <defaults>
</compile_context>

<pallas_src>
import functools

import jax
import jax.numpy as jnp
from jax.experimental import pallas as pl
from jax.experimental.pallas import tpu as pltpu


def _fused_gate_conv1x1_kernel(gate_ref, w_ref, x_ref, o_ref, *, compute_dtype):
    # gate_ref: (1, C_in)    pre-sigmoid per-channel gate
    # w_ref   : (tco, C_in)  tile of output channels, all input channels
    # x_ref   : (C_in, HW)   full activation matrix (resident across grid steps)
    # o_ref   : (tco, HW)
    g = jax.nn.sigmoid(gate_ref[...].astype(jnp.float32))          # (1, C_in), EUP
    # Fold the gate into this weight tile: scale in f32, cast once to the MXU dtype.
    w_scaled = (w_ref[...].astype(jnp.float32) * g).astype(compute_dtype)  # (tco, C_in)
    acc = jnp.dot(w_scaled, x_ref[...].astype(compute_dtype),
                  preferred_element_type=jnp.float32)               # MXU, f32 acc
    o_ref[...] = acc.astype(o_ref.dtype)


def _pick_cout_tile(c_out: int) -> int:
    """Pick a sublane-aligned (x8) C_out tile giving >=2 grid steps when possible.

    For C_out=224 this yields 112 -> grid=(2,), mapping 1:1 onto v7x's two TCs.
    """
    best = c_out
    for n_tiles in (2, 4, 7, 8, 14, 16, 28):
        if c_out % n_tiles == 0 and (c_out // n_tiles) % 8 == 0:
            best = c_out // n_tiles
            if best <= 512:
                break
    return best


def fused_sigmoid_mul_conv1x1(x_nchw, gate_nc11, weight_oi11, *,
                              block_cout=None, compute_dtype=jnp.bfloat16):
    """x_nchw: (1, C_in, H, W), gate_nc11: (1, C_in, 1, 1),
    weight_oi11: (C_out, C_in, 1, 1).  Returns (1, C_out, H, W)."""
    N, C_in, H, W = x_nchw.shape
    C_out = weight_oi11.shape[0]
    assert N == 1 and gate_nc11.shape == (N, C_in, 1, 1)
    HW = H * W

    # Free reshapes only (no transposes / HBM round trips, no wrapper casts).
    x_mat = x_nchw.reshape(C_in, HW)                 # (C_in, HW)
    gate = gate_nc11.reshape(1, C_in)                # (1, C_in)
    w = weight_oi11.reshape(C_out, C_in)             # (C_out, C_in)

    if block_cout is None:
        block_cout = _pick_cout_tile(C_out)
    assert C_out % block_cout == 0

    out_dtype = x_nchw.dtype
    bytes_accessed = (gate.size * gate.dtype.itemsize
                      + w.size * w.dtype.itemsize
                      + x_mat.size * x_mat.dtype.itemsize
                      + C_out * HW * jnp.dtype(out_dtype).itemsize)
    cost = pl.CostEstimate(flops=2 * C_out * C_in * HW,
                           transcendentals=C_in,
                           bytes_accessed=bytes_accessed)

    kernel = functools.partial(_fused_gate_conv1x1_kernel,
                               compute_dtype=compute_dtype)

    out_mat = pl.pallas_call(
        kernel,
        out_shape=jax.ShapeDtypeStruct((C_out, HW), out_dtype),
        grid_spec=pltpu.PrefetchScalarGridSpec(
            num_scalar_prefetch=0,
            grid=(C_out // block_cout,),
            in_specs=[
                pl.BlockSpec((1, C_in), lambda i: (0, 0)),            # gate
                pl.BlockSpec((block_cout, C_in), lambda i: (i, 0)),   # weight tile
                pl.BlockSpec((C_in, HW), lambda i: (0, 0)),           # x (resident)
            ],
            out_specs=pl.BlockSpec((block_cout, HW), lambda i: (i, 0)),
        ),
        compiler_params=pltpu.CompilerParams(
            dimension_semantics=("parallel",)),
        cost_estimate=cost,
    )(gate, w, x_mat)

    # (C_out, HW) is already the NCHW data layout for N == 1.
    return out_mat.reshape(N, C_out, H, W)


if __name__ == "__main__":
    # Shapes taken directly from the module: x531 (1,1344,14,14),
    # x535 (1,1344,1,1), Conv2d(1344 -> 224, k=1, bias=False).
    N, C_in, H, W, C_out = 1, 1344, 14, 14, 224

    key = jax.random.PRNGKey(0)
    kx, kg, kw = jax.random.split(key, 3)
    x531 = jax.random.normal(kx, (N, C_in, H, W), dtype=jnp.float32)
    x535 = jax.random.normal(kg, (N, C_in, 1, 1), dtype=jnp.float32)
    weight = jax.random.normal(kw, (C_out, C_in, 1, 1), dtype=jnp.float32) * 0.02

    out = jax.block_until_ready(fused_sigmoid_mul_conv1x1(x531, x535, weight))

    # Pure-JAX f32 reference of the same forward pass.
    gated = jax.nn.sigmoid(x535) * x531
    ref = jnp.einsum("nchw,oc->nohw", gated, weight.reshape(C_out, C_in))

    assert out.shape == (N, C_out, H, W)
    # bf16 MXU operands (f32 accumulation) over K=1344 -> loosened tolerance
    # vs. the pure-f32 reference, per the perf review.
    assert jnp.allclose(out, ref, atol=2e-2, rtol=2e-2)
    print("KERNEL_OK")
</pallas_src>

<mosaic_0001>
module attributes {stable_mosaic.version = 11 : i64} {
  func.func @_fused_gate_conv1x1_kernel(%arg0: i32, %arg1: memref<1x1344xf32, #tpu.memory_space<vmem>>, %arg2: memref<112x1344xf32, #tpu.memory_space<vmem>>, %arg3: memref<1344x196xf32, #tpu.memory_space<vmem>>, %arg4: memref<112x196xf32, #tpu.memory_space<vmem>>) attributes {dimension_semantics = [#tpu.dimension_semantics<parallel>], iteration_bounds = array<i64: 2>, scalar_prefetch = 0 : i64, scratch_operands = 0 : i64, tpu.core_type = #tpu.core_type<tc>, window_params = [{pipeline_mode = #tpu.pipeline_mode<synchronous>, transform_indices = @transform_0, window_bounds = array<i64: 1, 1344>}, {transform_indices = @transform_1, window_bounds = array<i64: 112, 1344>}, {pipeline_mode = #tpu.pipeline_mode<synchronous>, transform_indices = @transform_2, window_bounds = array<i64: 1344, 196>}, {transform_indices = @transform_3, window_bounds = array<i64: 112, 196>}]} {
    %c0 = arith.constant 0 : index
    %c0_0 = arith.constant 0 : index
    %0 = vector.load %arg1[%c0, %c0_0] : memref<1x1344xf32, #tpu.memory_space<vmem>>, vector<1x1344xf32>
    %1 = arith.negf %0 : vector<1x1344xf32>
    %2 = math.exp %1 : vector<1x1344xf32>
    %cst = arith.constant 1.000000e+00 : f32
    %3 = vector.broadcast %cst : f32 to vector<1x1344xf32>
    %4 = arith.addf %3, %2 : vector<1x1344xf32>
    %5 = arith.divf %3, %4 : vector<1x1344xf32>
    %c0_1 = arith.constant 0 : index
    %c0_2 = arith.constant 0 : index
    %6 = vector.load %arg2[%c0_1, %c0_2] : memref<112x1344xf32, #tpu.memory_space<vmem>>, vector<112x1344xf32>
    %7 = vector.broadcast %5 : vector<1x1344xf32> to vector<112x1344xf32>
    %8 = arith.mulf %6, %7 : vector<112x1344xf32>
    %9 = arith.truncf %8 : vector<112x1344xf32> to vector<112x1344xbf16>
    %c0_3 = arith.constant 0 : index
    %c0_4 = arith.constant 0 : index
    %10 = vector.load %arg3[%c0_3, %c0_4] : memref<1344x196xf32, #tpu.memory_space<vmem>>, vector<1344x196xf32>
    %11 = arith.truncf %10 : vector<1344x196xf32> to vector<1344x196xbf16>
    %cst_5 = arith.constant dense<0.000000e+00> : vector<112x196xf32>
    %12 = tpu.matmul %9, %11, %cst_5 {dimension_numbers = #tpu.dot_dimension_numbers<[1], [0], [0], [1], [0, 0, 1, 1], [], []>} : vector<112x1344xbf16>, vector<1344x196xbf16>, vector<112x196xf32> -> vector<112x196xf32>
    %c0_6 = arith.constant 0 : index
    %c0_7 = arith.constant 0 : index
    %13 = vector.load %arg4[%c0_6, %c0_7] : memref<112x196xf32, #tpu.memory_space<vmem>>, vector<112x196xf32>
    tpu.vector_store %arg4[%c0_6, %c0_7], %12 {strides = array<i32>} : memref<112x196xf32, #tpu.memory_space<vmem>>, vector<112x196xf32>,
    return
  }
  func.func @transform_0(%arg0: i32) -> (i32, i32) {
    %c0_i32 = arith.constant 0 : i32
    %c0_i32_0 = arith.constant 0 : i32
    %c0_i32_1 = arith.constant 0 : i32
    return %c0_i32, %c0_i32_0 : i32, i32
  }
  func.func @transform_1(%arg0: i32) -> (i32, i32) {
    %c0_i32 = arith.constant 0 : i32
    %c0_i32_0 = arith.constant 0 : i32
    return %arg0, %c0_i32 : i32, i32
  }
  func.func @transform_2(%arg0: i32) -> (i32, i32) {
    %c0_i32 = arith.constant 0 : i32
    %c0_i32_0 = arith.constant 0 : i32
    %c0_i32_1 = arith.constant 0 : i32
    return %c0_i32, %c0_i32_0 : i32, i32
  }
  func.func @transform_3(%arg0: i32) -> (i32, i32) {
    %c0_i32 = arith.constant 0 : i32
    %c0_i32_0 = arith.constant 0 : i32
    return %arg0, %c0_i32 : i32, i32
  }
}

</mosaic_0001>

<llo_original>
// kernel: tpu_custom_call.1
$region0: #{tpu_custom_call.1}
  #allocation0 [shape = 'u32[]', space=smem, size = 0x4, offset = 0x4, fixed_abs, tag = 'smem constant byte address 0x4 - core index']
  #allocation1 [shape = 'u32[144,128]{1,0:T(1,128)}', space=vmem, size = 0x12000, scoped, tag = 'internal scratch']
  %s0 = inlined_call_operand.vmem [shape: f32[1,1344], index: 0, kind: input, shape index: {}]
  %s1 = inlined_call_operand.vmem [shape: f32[224,1344], index: 1, kind: input, shape index: {}]
  %s2 = inlined_call_operand.vmem [shape: f32[1344,196], index: 2, kind: input, shape index: {}]
  %s3 = inlined_call_operand.vmem [shape: f32[224,196], index: 3, kind: output, shape index: {}]
  %s4 = sld [smem:[#allocation0]]
  $region45: #{tpu_custom_call.1} parent=0
    _
  %s6 = ssub.s32 1, %s4
  %s7 = scalar_select 0, %s6, %s4
  loop: start=0, step=1, limit=4
  $region2: #{tpu_custom_call.1} parent=0 // loop_pre_header
    _
  $region3: #{tpu_custom_call.1} parent=0 // loop_header
    %s9 = sphi 0, %s13
    %p10 = scmp.ge.s32.totalorder %s9, 4
    %s17 = sphi 0, %s17
    %s19 = sphi 0, %s17
    %s20 = sphi 0, %s19
    %s34 = sphi 0, %s20
    %s40 = sphi 0, %s42
    %s43 = sphi 0, %s40
    %s44 = sphi 0, %s43
    %s60 = sphi 0, %s44
    %s64 = sphi 0, %s64
    %s66 = sphi 0, %s64
    %s67 = sphi 0, %s66
    %s81 = sphi 0, %s67
    %s87 = sphi 0, %s89
    %s90 = sphi 0, %s87
    %s91 = sphi 0, %s90
    %s107 = sphi 0, %s91
  $region4: #{tpu_custom_call.1} parent=0 // loop_header_branch
    %12 = sbr.rel (%p10) target = $region8
  $region5: #{tpu_custom_call.1} parent=0 // loop_body
    %s14 = ssub.s32 %s9, 1
    %s15 = ssub.s32 %s9, 2
    %s16 = sadd.s32 %s9, 1
    %s18 = sadd.s32 %s17, 1
    %p21 = scmp.eq.s32.totalorder %s9, 1
    %p22 = scmp.ne.s32.totalorder %s17, %s19
    %p23 = scmp.eq.s32.totalorder %s9, 0
    %p24 = por %p22, %p23
    %p25 = scmp.ne.s32.totalorder %s17, %s19
    %p26 = scmp.eq.s32.totalorder %s14, 1
    %p27 = por %p25, %p26
    %p28 = scmp.ne.s32.totalorder %s19, %s20
    %p29 = scmp.eq.s32.totalorder %s14, 0
    %p30 = por %p28, %p29
    %p31 = scmp.ne.s32.totalorder %s19, %s20
    %p32 = scmp.eq.s32.totalorder %s15, 1
    %p33 = por %p31, %p32
    %p35 = scmp.ne.s32.totalorder %s20, %s34
    %p36 = scmp.eq.s32.totalorder %s15, 0
    %p37 = por %p35, %p36
    %s38 = ssub.s32 %s9, %s16
    %p39 = scmp.eq.s32.totalorder %s38, 0
    %s41 = sadd.s32 %s40, 1
    %s42 = scalar_select %p39, %s40, %s41
    %p45 = pneg %p39
    %p46 = scmp.eq.s32.totalorder %s9, 1
    %p47 = por %p45, %p46
    %p48 = scmp.ne.s32.totalorder %s40, %s43
    %p49 = scmp.eq.s32.totalorder %s9, 0
    %p50 = por %p48, %p49
    %p51 = scmp.ne.s32.totalorder %s40, %s43
    %p52 = scmp.eq.s32.totalorder %s14, 1
    %p53 = por %p51, %p52
    %p54 = scmp.ne.s32.totalorder %s43, %s44
    %p55 = scmp.eq.s32.totalorder %s14, 0
    %p56 = por %p54, %p55
    %p57 = scmp.ne.s32.totalorder %s43, %s44
    %p58 = scmp.eq.s32.totalorder %s15, 1
    %p59 = por %p57, %p58
    %p61 = scmp.ne.s32.totalorder %s44, %s60
    %p62 = scmp.eq.s32.totalorder %s15, 0
    %p63 = por %p61, %p62
    %s65 = sadd.s32 %s64, 1
    %p68 = scmp.eq.s32.totalorder %s9, 1
    %p69 = scmp.ne.s32.totalorder %s64, %s66
    %p70 = scmp.eq.s32.totalorder %s9, 0
    %p71 = por %p69, %p70
    %p72 = scmp.ne.s32.totalorder %s64, %s66
    %p73 = scmp.eq.s32.totalorder %s14, 1
    %p74 = por %p72, %p73
    %p75 = scmp.ne.s32.totalorder %s66, %s67
    %p76 = scmp.eq.s32.totalorder %s14, 0
    %p77 = por %p75, %p76
    %p78 = scmp.ne.s32.totalorder %s66, %s67
    %p79 = scmp.eq.s32.totalorder %s15, 1
    %p80 = por %p78, %p79
    %p82 = scmp.ne.s32.totalorder %s67, %s81
    %p83 = scmp.eq.s32.totalorder %s15, 0
    %p84 = por %p82, %p83
    %s85 = ssub.s32 %s9, %s16
    %p86 = scmp.eq.s32.totalorder %s85, 0
    %s88 = sadd.s32 %s87, 1
    %s89 = scalar_select %p86, %s87, %s88
    %p92 = pneg %p86
    %p93 = scmp.eq.s32.totalorder %s9, 1
    %p94 = por %p92, %p93
    %p95 = scmp.ne.s32.totalorder %s87, %s90
    %p96 = scmp.eq.s32.totalorder %s9, 0
    %p97 = por %p95, %p96
    %p98 = scmp.ne.s32.totalorder %s87, %s90
    %p99 = scmp.eq.s32.totalorder %s14, 1
    %p100 = por %p98, %p99
    %p101 = scmp.ne.s32.totalorder %s90, %s91
    %p102 = scmp.eq.s32.totalorder %s14, 0
    %p103 = por %p101, %p102
    %p104 = scmp.ne.s32.totalorder %s90, %s91
    %p105 = scmp.eq.s32.totalorder %s15, 1
    %p106 = por %p104, %p105
    %p108 = scmp.ne.s32.totalorder %s91, %s107
    %p109 = scmp.eq.s32.totalorder %s15, 0
    %p110 = por %p108, %p109
    %p111 = scmp.le.s32.totalorder 1, %s9
    %p112 = scmp.lt.s32.totalorder %s9, 3
    %p113 = pnand %p111, %p112
    %p114 = pneg %p113
    // Predicated region
    $region9: #{tpu_custom_call.1} parent=5 // pred_check
      _
    $region10: #{tpu_custom_call.1} parent=5 // pred_check_branch
      %116 = sbr.rel (%p113) target = $region12
    $region11: #{tpu_custom_call.1} parent=5 // pred_region
      %s117 = ssub.s32 %s9, 1
      // Predicated region
      $region13: #{tpu_custom_call.1} parent=11 // pred_check
        %p118 = pneg %p30
      $region14: #{tpu_custom_call.1} parent=11 // pred_check_branch
        %120 = sbr.rel (%p118) target = $region16
      $region15: #{tpu_custom_call.1} parent=11 // pred_region
        _
      $region16: #{tpu_custom_call.1} parent=11 // pred_fallthru
        _
      // Predicated region
      $region17: #{tpu_custom_call.1} parent=11 // pred_check
        %p121 = pneg %p77
      $region18: #{tpu_custom_call.1} parent=11 // pred_check_branch
        %123 = sbr.rel (%p121) target = $region20
      $region19: #{tpu_custom_call.1} parent=11 // pred_region
        _
      $region20: #{tpu_custom_call.1} parent=11 // pred_fallthru
        _
    $region12: #{tpu_custom_call.1} parent=5 // pred_fallthru
      _
    %p124 = scmp.lt.s32.totalorder %s9, 2
    // Predicated region
    $region21: #{tpu_custom_call.1} parent=5 // pred_check
      %p125 = pneg %p124
    $region22: #{tpu_custom_call.1} parent=5 // pred_check_branch
      %127 = sbr.rel (%p125) target = $region24
    $region23: #{tpu_custom_call.1} parent=5 // pred_region
      // Predicated region
      $region25: #{tpu_custom_call.1} parent=23 // pred_check
        %p128 = pneg %p50
      $region26: #{tpu_custom_call.1} parent=23 // pred_check_branch
        %130 = sbr.rel (%p128) target = $region28
      $region27: #{tpu_custom_call.1} parent=23 // pred_region
        %s131 = smul.u32 14, %s9
        %p132 = scmp.lt.s32.totalorder %s131, 27
        %s133 = scalar_select %p132, %s131, 27
        %s134 = smul.addr %s133, 11
        %s135 = smul.addr %s134, 8
        %s136 = scalar_lea.vmem %s1, %s135
        %s137 = smul.u32 14, %s9
      $region28: #{tpu_custom_call.1} parent=23 // pred_fallthru
        _
    $region24: #{tpu_custom_call.1} parent=5 // pred_fallthru
      _
    %p138 = scmp.le.s32.totalorder 1, %s9
    %p139 = scmp.lt.s32.totalorder %s9, 3
    %p140 = pnand %p138, %p139
    %p141 = pneg %p140
    // Predicated region
    $region29: #{tpu_custom_call.1} parent=5 // pred_check
      _
    $region30: #{tpu_custom_call.1} parent=5 // pred_check_branch
      %143 = sbr.rel (%p140) target = $region32
    $region31: #{tpu_custom_call.1} parent=5 // pred_region
      %s144 = ssub.s32 %s9, 1
      %p145 = pneg %p30
      %p146 = pneg %p27
      %s147 = smul.u32 14, %s14
      %p148 = scmp.lt.s32.totalorder %s147, 27
      %s149 = scalar_select %p148, %s147, 27
      %s150 = smul.addr %s149, 11
      %s151 = smul.addr %s150, 8
      %s152 = scalar_lea.vmem %s1, %s151
      %p153 = pneg %p56
      %p154 = pneg %p53
      %p155 = pneg %p77
      %p156 = pneg %p74
      %p157 = pneg %p103
      %p158 = pneg %p100
      %s159 = smul.u32 14, %s14
      %p160 = scmp.lt.s32.totalorder %s159, 27
      %s161 = scalar_select %p160, %s159, 27
      %s162 = smul.addr %s161, 2
      %s163 = smul.addr %s162, 8
      %s164 = scalar_lea.vmem %s3, %s163
      %s165 = smul.u32 14, %s14
      %p166 = scmp.lt.s32.totalorder %s165, 27
      %s167 = scalar_select %p166, %s165, 27
      %s168 = smul.addr %s167, 11
      %s169 = smul.addr %s168, 8
      %s170 = scalar_lea.vmem %s1, %s169
      %s171 = smul.u32 14, %s14
      %s172 = smul.u32 14, %s14
      %p173 = scmp.lt.s32.totalorder %s172, 27
      %s174 = scalar_select %p173, %s172, 27
      %s175 = smul.addr %s174, 2
      %s176 = smul.addr %s175, 8
      %s177 = scalar_lea.vmem %s3, %s176
      %s178 = smul.u32 14, %s14
      %v180 = vld [vmem:[%s0] sm:$0xff]
      %v181 = vld [vmem:[%s0 + $0x8] sm:$0x7]
      %v182 = vxor.u32 %v180, 2147483648
      %v183 = vxor.u32 %v181, 2147483648
      %v184 = vmul.f32 %v182, 1.442695
      %v185 = vpow.pop %v184
      %v186 = vmul.f32 %v183, 1.442695
      %v187 = vpow.pop %v186
      %v188 = vadd.f32 %v185, 1.0
      %v189 = vadd.f32 %v187, 1.0
      %v190 = vrcp.pop %v188
      %v191 = vmul.f32 1.0, %v190
      %v192 = vrcp.pop %v189
      %v193 = vmul.f32 1.0, %v192
      %v194 = vld [vmem:[%s170] sm:$0xff]
      %v195 = vld [vmem:[%s170 + $0x8] sm:$0xff]
      %v196 = vld [vmem:[%s170 + $0x10] sm:$0xff]
      %v197 = vld [vmem:[%s170 + $0x18] sm:$0xff]
      %v198 = vld [vmem:[%s170 + $0x20] sm:$0xff]
      %v199 = vld [vmem:[%s170 + $0x28] sm:$0xff]
      %v200 = vld [vmem:[%s170 + $0x30] sm:$0xff]
      %v201 = vld [vmem:[%s170 + $0x38] sm:$0xff]
      %v202 = vld [vmem:[%s170 + $0x40] sm:$0xff]
      %v203 = vld [vmem:[%s170 + $0x48] sm:$0xff]
      %v204 = vld [vmem:[%s170 + $0x50] sm:$0xff]
      %v205 = vld [vmem:[%s170 + $0x58] sm:$0xff]
      %v206 = vld [vmem:[%s170 + $0x60] sm:$0xff]
      %v207 = vld [vmem:[%s170 + $0x68] sm:$0xff]
      %v208 = vld [vmem:[%s170 + $0x70] sm:$0xff]
      %v209 = vld [vmem:[%s170 + $0x78] sm:$0xff]
      %v210 = vld [vmem:[%s170 + $0x80] sm:$0xff]
      %v211 = vld [vmem:[%s170 + $0x88] sm:$0xff]
      %v212 = vld [vmem:[%s170 + $0x90] sm:$0xff]
      %v213 = vld [vmem:[%s170 + $0x98] sm:$0xff]
      %v214 = vld [vmem:[%s170 + $0xa0] sm:$0xff]
      %v215 = vld [vmem:[%s170 + $0xa8] sm:$0xff]
      %v216 = vld [vmem:[%s170 + $0xb0] sm:$0xff]
      %v217 = vld [vmem:[%s170 + $0xb8] sm:$0xff]
      %v218 = vld [vmem:[%s170 + $0xc0] sm:$0xff]
      %v219 = vld [vmem:[%s170 + $0xc8] sm:$0xff]
      %v220 = vld [vmem:[%s170 + $0xd0] sm:$0xff]
      %v221 = vld [vmem:[%s170 + $0xd8] sm:$0xff]
      %v222 = vld [vmem:[%s170 + $0xe0] sm:$0xff]
      %v223 = vld [vmem:[%s170 + $0xe8] sm:$0xff]
      %v224 = vld [vmem:[%s170 + $0xf0] sm:$0xff]
      %v225 = vld [vmem:[%s170 + $0xf8] sm:$0xff]
      %v226 = vld [vmem:[%s170 + $0x100] sm:$0xff]
      %v227 = vld [vmem:[%s170 + $0x108] sm:$0xff]
      %v228 = vld [vmem:[%s170 + $0x110] sm:$0xff]
      %v229 = vld [vmem:[%s170 + $0x118] sm:$0xff]
      %v230 = vld [vmem:[%s170 + $0x120] sm:$0xff]
      %v231 = vld [vmem:[%s170 + $0x128] sm:$0xff]
      %v232 = vld [vmem:[%s170 + $0x130] sm:$0xff]
      %v233 = vld [vmem:[%s170 + $0x138] sm:$0xff]
      %v234 = vld [vmem:[%s170 + $0x140] sm:$0xff]
      %v235 = vld [vmem:[%s170 + $0x148] sm:$0xff]
      %v236 = vld [vmem:[%s170 + $0x150] sm:$0xff]
      %v237 = vld [vmem:[%s170 + $0x158] sm:$0xff]
      %v238 = vld [vmem:[%s170 + $0x160] sm:$0xff]
      %v239 = vld [vmem:[%s170 + $0x168] sm:$0xff]
      %v240 = vld [vmem:[%s170 + $0x170] sm:$0xff]
      %v241 = vld [vmem:[%s170 + $0x178] sm:$0xff]
      %v242 = vld [vmem:[%s170 + $0x180] sm:$0xff]
      %v243 = vld [vmem:[%s170 + $0x188] sm:$0xff]
      %v244 = vld [vmem:[%s170 + $0x190] sm:$0xff]
      %v245 = vld [vmem:[%s170 + $0x198] sm:$0xff]
      %v246 = vld [vmem:[%s170 + $0x1a0] sm:$0xff]
      %v247 = vld [vmem:[%s170 + $0x1a8] sm:$0xff]
      %v248 = vld [vmem:[%s170 + $0x1b0] sm:$0xff]
      %v249 = vld [vmem:[%s170 + $0x1b8] sm:$0xff]
      %v250 = vld [vmem:[%s170 + $0x1c0] sm:$0xff]
      %v251 = vld [vmem:[%s170 + $0x1c8] sm:$0xff]
      %v252 = vld [vmem:[%s170 + $0x1d0] sm:$0xff]
      %v253 = vld [vmem:[%s170 + $0x1d8] sm:$0xff]
      %v254 = vld [vmem:[%s170 + $0x1e0] sm:$0xff]
      %v255 = vld [vmem:[%s170 + $0x1e8] sm:$0xff]
      %v256 = vld [vmem:[%s170 + $0x1f0] sm:$0xff]
      %v257 = vld [vmem:[%s170 + $0x1f8] sm:$0xff]
      %v258 = vld [vmem:[%s170 + $0x200] sm:$0xff]
      %v259 = vld [vmem:[%s170 + $0x208] sm:$0xff]
      %v260 = vld [vmem:[%s170 + $0x210] sm:$0xff]
      %v261 = vld [vmem:[%s170 + $0x218] sm:$0xff]
      %v262 = vld [vmem:[%s170 + $0x220] sm:$0xff]
      %v263 = vld [vmem:[%s170 + $0x228] sm:$0xff]
      %v264 = vld [vmem:[%s170 + $0x230] sm:$0xff]
      %v265 = vld [vmem:[%s170 + $0x238] sm:$0xff]
      %v266 = vld [vmem:[%s170 + $0x240] sm:$0xff]
      %v267 = vld [vmem:[%s170 + $0x248] sm:$0xff]
      %v268 = vld [vmem:[%s170 + $0x250] sm:$0xff]
      %v269 = vld [vmem:[%s170 + $0x258] sm:$0xff]
      %v270 = vld [vmem:[%s170 + $0x260] sm:$0xff]
      %v271 = vld [vmem:[%s170 + $0x268] sm:$0xff]
      %v272 = vld [vmem:[%s170 + $0x270] sm:$0xff]
      %v273 = vld [vmem:[%s170 + $0x278] sm:$0xff]
      %v274 = vld [vmem:[%s170 + $0x280] sm:$0xff]
      %v275 = vld [vmem:[%s170 + $0x288] sm:$0xff]
      %v276 = vld [vmem:[%s170 + $0x290] sm:$0xff]
      %v277 = vld [vmem:[%s170 + $0x298] sm:$0xff]
      %v278 = vld [vmem:[%s170 + $0x2a0] sm:$0xff]
      %v279 = vld [vmem:[%s170 + $0x2a8] sm:$0xff]
      %v280 = vld [vmem:[%s170 + $0x2b0] sm:$0xff]
      %v281 = vld [vmem:[%s170 + $0x2b8] sm:$0xff]
      %v282 = vld [vmem:[%s170 + $0x2c0] sm:$0xff]
      %v283 = vld [vmem:[%s170 + $0x2c8] sm:$0xff]
      %v284 = vld [vmem:[%s170 + $0x2d0] sm:$0xff]
      %v285 = vld [vmem:[%s170 + $0x2d8] sm:$0xff]
      %v286 = vld [vmem:[%s170 + $0x2e0] sm:$0xff]
      %v287 = vld [vmem:[%s170 + $0x2e8] sm:$0xff]
      %v288 = vld [vmem:[%s170 + $0x2f0] sm:$0xff]
      %v289 = vld [vmem:[%s170 + $0x2f8] sm:$0xff]
      %v290 = vld [vmem:[%s170 + $0x300] sm:$0xff]
      %v291 = vld [vmem:[%s170 + $0x308] sm:$0xff]
      %v292 = vld [vmem:[%s170 + $0x310] sm:$0xff]
      %v293 = vld [vmem:[%s170 + $0x318] sm:$0xff]
      %v294 = vld [vmem:[%s170 + $0x320] sm:$0xff]
      %v295 = vld [vmem:[%s170 + $0x328] sm:$0xff]
      %v296 = vld [vmem:[%s170 + $0x330] sm:$0xff]
      %v297 = vld [vmem:[%s170 + $0x338] sm:$0xff]
      %v298 = vld [vmem:[%s170 + $0x340] sm:$0xff]
      %v299 = vld [vmem:[%s170 + $0x348] sm:$0xff]
      %v300 = vld [vmem:[%s170 + $0x350] sm:$0xff]
      %v301 = vld [vmem:[%s170 + $0x358] sm:$0xff]
      %v302 = vld [vmem:[%s170 + $0x360] sm:$0xff]
      %v303 = vld [vmem:[%s170 + $0x368] sm:$0xff]
      %v304 = vld [vmem:[%s170 + $0x370] sm:$0xff]
      %v305 = vld [vmem:[%s170 + $0x378] sm:$0xff]
      %v306 = vld [vmem:[%s170 + $0x380] sm:$0xff]
      %v307 = vld [vmem:[%s170 + $0x388] sm:$0xff]
      %v308 = vld [vmem:[%s170 + $0x390] sm:$0xff]
      %v309 = vld [vmem:[%s170 + $0x398] sm:$0xff]
      %v310 = vld [vmem:[%s170 + $0x3a0] sm:$0xff]
      %v311 = vld [vmem:[%s170 + $0x3a8] sm:$0xff]
      %v312 = vld [vmem:[%s170 + $0x3b0] sm:$0xff]
      %v313 = vld [vmem:[%s170 + $0x3b8] sm:$0xff]
      %v314 = vld [vmem:[%s170 + $0x3c0] sm:$0xff]
      %v315 = vld [vmem:[%s170 + $0x3c8] sm:$0xff]
      %v316 = vld [vmem:[%s170 + $0x3d0] sm:$0xff]
      %v317 = vld [vmem:[%s170 + $0x3d8] sm:$0xff]
      %v318 = vld [vmem:[%s170 + $0x3e0] sm:$0xff]
      %v319 = vld [vmem:[%s170 + $0x3e8] sm:$0xff]
      %v320 = vld [vmem:[%s170 + $0x3f0] sm:$0xff]
      %v321 = vld [vmem:[%s170 + $0x3f8] sm:$0xff]
      %v322 = vld [vmem:[%s170 + $0x400] sm:$0xff]
      %v323 = vld [vmem:[%s170 + $0x408] sm:$0xff]
      %v324 = vld [vmem:[%s170 + $0x410] sm:$0xff]
      %v325 = vld [vmem:[%s170 + $0x418] sm:$0xff]
      %v326 = vld [vmem:[%s170 + $0x420] sm:$0xff]
      %v327 = vld [vmem:[%s170 + $0x428] sm:$0xff]
      %v328 = vld [vmem:[%s170 + $0x430] sm:$0xff]
      %v329 = vld [vmem:[%s170 + $0x438] sm:$0xff]
      %v330 = vld [vmem:[%s170 + $0x440] sm:$0xff]
      %v331 = vld [vmem:[%s170 + $0x448] sm:$0xff]
      %v332 = vld [vmem:[%s170 + $0x450] sm:$0xff]
      %v333 = vld [vmem:[%s170 + $0x458] sm:$0xff]
      %v334 = vld [vmem:[%s170 + $0x460] sm:$0xff]
      %v335 = vld [vmem:[%s170 + $0x468] sm:$0xff]
      %v336 = vld [vmem:[%s170 + $0x470] sm:$0xff]
      %v337 = vld [vmem:[%s170 + $0x478] sm:$0xff]
      %v338 = vld [vmem:[%s170 + $0x480] sm:$0xff]
      %v339 = vld [vmem:[%s170 + $0x488] sm:$0xff]
      %v340 = vld [vmem:[%s170 + $0x490] sm:$0xff]
      %v341 = vld [vmem:[%s170 + $0x498] sm:$0xff]
      %v342 = vld [vmem:[%s170 + $0x4a0] sm:$0xff]
      %v343 = vld [vmem:[%s170 + $0x4a8] sm:$0xff]
      %v344 = vld [vmem:[%s170 + $0x4b0] sm:$0xff]
      %v345 = vld [vmem:[%s170 + $0x4b8] sm:$0xff]
      %v346 = vld [vmem:[%s170 + $0x4c0] sm:$0xff]
      %v347 = vld [vmem:[%s170 + $0x4c8] sm:$0xff]
      %v350 = vlaneseq
      %v351 = vshrl.u32 %v350, 7
      %v352 = vsub.s32 0, %v351
      %v353 = vrot.slane %v191, %v352
      %v354 = vlaneseq
      %v355 = vshrl.u32 %v354, 7
      %v356 = vsub.s32 1, %v355
      %v357 = vrot.slane %v191, %v356
      %v358 = vlaneseq
      %v359 = vshrl.u32 %v358, 7
      %v360 = vsub.s32 2, %v359
      %v361 = vrot.slane %v191, %v360
      %v362 = vlaneseq
      %v363 = vshrl.u32 %v362, 7
      %v364 = vsub.s32 3, %v363
      %v365 = vrot.slane %v191, %v364
      %v366 = vlaneseq
      %v367 = vshrl.u32 %v366, 7
      %v368 = vsub.s32 4, %v367
      %v369 = vrot.slane %v191, %v368
      %v370 = vlaneseq
      %v371 = vshrl.u32 %v370, 7
      %v372 = vsub.s32 5, %v371
      %v373 = vrot.slane %v191, %v372
      %v374 = vlaneseq
      %v375 = vshrl.u32 %v374, 7
      %v376 = vsub.s32 6, %v375
      %v377 = vrot.slane %v191, %v376
      %v378 = vlaneseq
      %v379 = vshrl.u32 %v378, 7
      %v380 = vsub.s32 7, %v379
      %v381 = vrot.slane %v191, %v380
      %v382 = vlaneseq
      %v383 = vshrl.u32 %v382, 7
      %v384 = vsub.s32 0, %v383
      %v385 = vrot.slane %v193, %v384
      %v386 = vlaneseq
      %v387 = vshrl.u32 %v386, 7
      %v388 = vsub.s32 1, %v387
      %v389 = vrot.slane %v193, %v388
      %v390 = vlaneseq
      %v391 = vshrl.u32 %v390, 7
      %v392 = vsub.s32 2, %v391
      %v393 = vrot.slane %v193, %v392
      %v405 = vmul.f32 %v194, %v353
      %v406 = vmul.f32 %v195, %v357
      %v407 = vmul.f32 %v196, %v361
      %v408 = vmul.f32 %v197, %v365
      %v409 = vmul.f32 %v198, %v369
      %v410 = vmul.f32 %v199, %v373
      %v411 = vmul.f32 %v200, %v377
      %v412 = vmul.f32 %v201, %v381
      %v413 = vmul.f32 %v202, %v385
      %v414 = vmul.f32 %v203, %v389
      %v415 = vmul.f32 %v204, %v393
      %v416 = vmul.f32 %v205, %v353
      %v417 = vmul.f32 %v206, %v357
      %v418 = vmul.f32 %v207, %v361
      %v419 = vmul.f32 %v208, %v365
      %v420 = vmul.f32 %v209, %v369
      %v421 = vmul.f32 %v210, %v373
      %v422 = vmul.f32 %v211, %v377
      %v423 = vmul.f32 %v212, %v381
      %v424 = vmul.f32 %v213, %v385
      %v425 = vmul.f32 %v214, %v389
      %v426 = vmul.f32 %v215, %v393
      %v427 = vmul.f32 %v216, %v353
      %v428 = vmul.f32 %v217, %v357
      %v429 = vmul.f32 %v218, %v361
      %v430 = vmul.f32 %v219, %v365
      %v431 = vmul.f32 %v220, %v369
      %v432 = vmul.f32 %v221, %v373
      %v433 = vmul.f32 %v222, %v377
      %v434 = vmul.f32 %v223, %v381
      %v435 = vmul.f32 %v224, %v385
      %v436 = vmul.f32 %v225, %v389
      %v437 = vmul.f32 %v226, %v393
      %v438 = vmul.f32 %v227, %v353
      %v439 = vmul.f32 %v228, %v357
      %v440 = vmul.f32 %v229, %v361
      %v441 = vmul.f32 %v230, %v365
      %v442 = vmul.f32 %v231, %v369
      %v443 = vmul.f32 %v232, %v373
      %v444 = vmul.f32 %v233, %v377
      %v445 = vmul.f32 %v234, %v381
      %v446 = vmul.f32 %v235, %v385
      %v447 = vmul.f32 %v236, %v389
      %v448 = vmul.f32 %v237, %v393
      %v449 = vmul.f32 %v238, %v353
      %v450 = vmul.f32 %v239, %v357
      %v451 = vmul.f32 %v240, %v361
      %v452 = vmul.f32 %v241, %v365
      %v453 = vmul.f32 %v242, %v369
      %v454 = vmul.f32 %v243, %v373
      %v455 = vmul.f32 %v244, %v377
      %v456 = vmul.f32 %v245, %v381
      %v457 = vmul.f32 %v246, %v385
      %v458 = vmul.f32 %v247, %v389
      %v459 = vmul.f32 %v248, %v393
      %v460 = vmul.f32 %v249, %v353
      %v461 = vmul.f32 %v250, %v357
      %v462 = vmul.f32 %v251, %v361
      %v463 = vmul.f32 %v252, %v365
      %v464 = vmul.f32 %v253, %v369
      %v465 = vmul.f32 %v254, %v373
      %v466 = vmul.f32 %v255, %v377
      %v467 = vmul.f32 %v256, %v381
      %v468 = vmul.f32 %v257, %v385
      %v469 = vmul.f32 %v258, %v389
      %v470 = vmul.f32 %v259, %v393
      %v471 = vmul.f32 %v260, %v353
      %v472 = vmul.f32 %v261, %v357
      %v473 = vmul.f32 %v262, %v361
      %v474 = vmul.f32 %v263, %v365
      %v475 = vmul.f32 %v264, %v369
      %v476 = vmul.f32 %v265, %v373
      %v477 = vmul.f32 %v266, %v377
      %v478 = vmul.f32 %v267, %v381
      %v479 = vmul.f32 %v268, %v385
      %v480 = vmul.f32 %v269, %v389
      %v481 = vmul.f32 %v270, %v393
      %v482 = vmul.f32 %v271, %v353
      %v483 = vmul.f32 %v272, %v357
      %v484 = vmul.f32 %v273, %v361
      %v485 = vmul.f32 %v274, %v365
      %v486 = vmul.f32 %v275, %v369
      %v487 = vmul.f32 %v276, %v373
      %v488 = vmul.f32 %v277, %v377
      %v489 = vmul.f32 %v278, %v381
      %v490 = vmul.f32 %v279, %v385
      %v491 = vmul.f32 %v280, %v389
      %v492 = vmul.f32 %v281, %v393
      %v493 = vmul.f32 %v282, %v353
      %v494 = vmul.f32 %v283, %v357
      %v495 = vmul.f32 %v284, %v361
      %v496 = vmul.f32 %v285, %v365
      %v497 = vmul.f32 %v286, %v369
      %v498 = vmul.f32 %v287, %v373
      %v499 = vmul.f32 %v288, %v377
      %v500 = vmul.f32 %v289, %v381
      %v501 = vmul.f32 %v290, %v385
      %v502 = vmul.f32 %v291, %v389
      %v503 = vmul.f32 %v292, %v393
      %v504 = vmul.f32 %v293, %v353
      %v505 = vmul.f32 %v294, %v357
      %v506 = vmul.f32 %v295, %v361
      %v507 = vmul.f32 %v296, %v365
      %v508 = vmul.f32 %v297, %v369
      %v509 = vmul.f32 %v298, %v373
      %v510 = vmul.f32 %v299, %v377
      %v511 = vmul.f32 %v300, %v381
      %v512 = vmul.f32 %v301, %v385
      %v513 = vmul.f32 %v302, %v389
      %v514 = vmul.f32 %v303, %v393
      %v515 = vmul.f32 %v304, %v353
      %v516 = vmul.f32 %v305, %v357
      %v517 = vmul.f32 %v306, %v361
      %v518 = vmul.f32 %v307, %v365
      %v519 = vmul.f32 %v308, %v369
      %v520 = vmul.f32 %v309, %v373
      %v521 = vmul.f32 %v310, %v377
      %v522 = vmul.f32 %v311, %v381
      %v523 = vmul.f32 %v312, %v385
      %v524 = vmul.f32 %v313, %v389
      %v525 = vmul.f32 %v314, %v393
      %v526 = vmul.f32 %v315, %v353
      %v527 = vmul.f32 %v316, %v357
      %v528 = vmul.f32 %v317, %v361
      %v529 = vmul.f32 %v318, %v365
      %v530 = vmul.f32 %v319, %v369
      %v531 = vmul.f32 %v320, %v373
      %v532 = vmul.f32 %v321, %v377
      %v533 = vmul.f32 %v322, %v381
      %v534 = vmul.f32 %v323, %v385
      %v535 = vmul.f32 %v324, %v389
      %v536 = vmul.f32 %v325, %v393
      %v537 = vmul.f32 %v326, %v353
      %v538 = vmul.f32 %v327, %v357
      %v539 = vmul.f32 %v328, %v361
      %v540 = vmul.f32 %v329, %v365
      %v541 = vmul.f32 %v330, %v369
      %v542 = vmul.f32 %v331, %v373
      %v543 = vmul.f32 %v332, %v377
      %v544 = vmul.f32 %v333, %v381
      %v545 = vmul.f32 %v334, %v385
      %v546 = vmul.f32 %v335, %v389
      %v547 = vmul.f32 %v336, %v393
      %v548 = vmul.f32 %v337, %v353
      %v549 = vmul.f32 %v338, %v357
      %v550 = vmul.f32 %v339, %v361
      %v551 = vmul.f32 %v340, %v365
      %v552 = vmul.f32 %v341, %v369
      %v553 = vmul.f32 %v342, %v373
      %v554 = vmul.f32 %v343, %v377
      %v555 = vmul.f32 %v344, %v381
      %v556 = vmul.f32 %v345, %v385
      %v557 = vmul.f32 %v346, %v389
      %v558 = vmul.f32 %v347, %v393
      %v559 = vpack.c.bf16 %v416, %v405
      %v560 = vpack.c.bf16 %v417, %v406
      %v561 = vpack.c.bf16 %v418, %v407
      %v562 = vpack.c.bf16 %v419, %v408
      %v563 = vpack.c.bf16 %v420, %v409
      %v564 = vpack.c.bf16 %v421, %v410
      %v565 = vpack.c.bf16 %v422, %v411
      %v566 = vpack.c.bf16 %v423, %v412
      %v567 = vpack.c.bf16 %v424, %v413
      %v568 = vpack.c.bf16 %v425, %v414
      %v569 = vpack.c.bf16 %v426, %v415
      %v570 = vpack.c.bf16 %v438, %v427
      %v571 = vpack.c.bf16 %v439, %v428
      %v572 = vpack.c.bf16 %v440, %v429
      %v573 = vpack.c.bf16 %v441, %v430
      %v574 = vpack.c.bf16 %v442, %v431
      %v575 = vpack.c.bf16 %v443, %v432
      %v576 = vpack.c.bf16 %v444, %v433
      %v577 = vpack.c.bf16 %v445, %v434
      %v578 = vpack.c.bf16 %v446, %v435
      %v579 = vpack.c.bf16 %v447, %v436
      %v580 = vpack.c.bf16 %v448, %v437
      %v581 = vpack.c.bf16 %v460, %v449
      %v582 = vpack.c.bf16 %v461, %v450
      %v583 = vpack.c.bf16 %v462, %v451
      %v584 = vpack.c.bf16 %v463, %v452
      %v585 = vpack.c.bf16 %v464, %v453
      %v586 = vpack.c.bf16 %v465, %v454
      %v587 = vpack.c.bf16 %v466, %v455
      %v588 = vpack.c.bf16 %v467, %v456
      %v589 = vpack.c.bf16 %v468, %v457
      %v590 = vpack.c.bf16 %v469, %v458
      %v591 = vpack.c.bf16 %v470, %v459
      %v592 = vpack.c.bf16 %v482, %v471
      %v593 = vpack.c.bf16 %v483, %v472
      %v594 = vpack.c.bf16 %v484, %v473
      %v595 = vpack.c.bf16 %v485, %v474
      %v596 = vpack.c.bf16 %v486, %v475
      %v597 = vpack.c.bf16 %v487, %v476
      %v598 = vpack.c.bf16 %v488, %v477
      %v599 = vpack.c.bf16 %v489, %v478
      %v600 = vpack.c.bf16 %v490, %v479
      %v601 = vpack.c.bf16 %v491, %v480
      %v602 = vpack.c.bf16 %v492, %v481
      %v603 = vpack.c.bf16 %v504, %v493
      %v604 = vpack.c.bf16 %v505, %v494
      %v605 = vpack.c.bf16 %v506, %v495
      %v606 = vpack.c.bf16 %v507, %v496
      %v607 = vpack.c.bf16 %v508, %v497
      %v608 = vpack.c.bf16 %v509, %v498
      %v609 = vpack.c.bf16 %v510, %v499
      %v610 = vpack.c.bf16 %v511, %v500
      %v611 = vpack.c.bf16 %v512, %v501
      %v612 = vpack.c.bf16 %v513, %v502
      %v613 = vpack.c.bf16 %v514, %v503
      %v614 = vpack.c.bf16 %v526, %v515
      %v615 = vpack.c.bf16 %v527, %v516
      %v616 = vpack.c.bf16 %v528, %v517
      %v617 = vpack.c.bf16 %v529, %v518
      %v618 = vpack.c.bf16 %v530, %v519
      %v619 = vpack.c.bf16 %v531, %v520
      %v620 = vpack.c.bf16 %v532, %v521
      %v621 = vpack.c.bf16 %v533, %v522
      %v622 = vpack.c.bf16 %v534, %v523
      %v623 = vpack.c.bf16 %v535, %v524
      %v624 = vpack.c.bf16 %v536, %v525
      %v625 = vpack.c.bf16 %v548, %v537
      %v626 = vpack.c.bf16 %v549, %v538
      %v627 = vpack.c.bf16 %v550, %v539
      %v628 = vpack.c.bf16 %v551, %v540
      %v629 = vpack.c.bf16 %v552, %v541
      %v630 = vpack.c.bf16 %v553, %v542
      %v631 = vpack.c.bf16 %v554, %v543
      %v632 = vpack.c.bf16 %v555, %v544
      %v633 = vpack.c.bf16 %v556, %v545
      %v634 = vpack.c.bf16 %v557, %v546
      %v635 = vpack.c.bf16 %v558, %v547
      %v636 = vld [vmem:[%s2] sm:$0xff]
      %v637 = vld [vmem:[%s2 + $0x8] sm:$0xff]
      %v638 = vld [vmem:[%s2 + $0x10] sm:$0xff]
      %v639 = vld [vmem:[%s2 + $0x18] sm:$0xff]
      %v640 = vld [vmem:[%s2 + $0x20] sm:$0xff]
      %v641 = vld [vmem:[%s2 + $0x28] sm:$0xff]
      %v642 = vld [vmem:[%s2 + $0x30] sm:$0xff]
      %v643 = vld [vmem:[%s2 + $0x38] sm:$0xff]
      %v644 = vld [vmem:[%s2 + $0x40] sm:$0xff]
      %v645 = vld [vmem:[%s2 + $0x48] sm:$0xff]
      %v646 = vld [vmem:[%s2 + $0x50] sm:$0xff]
      %v647 = vld [vmem:[%s2 + $0x58] sm:$0xff]
      %v648 = vld [vmem:[%s2 + $0x60] sm:$0xff]
      %v649 = vld [vmem:[%s2 + $0x68] sm:$0xff]
      %v650 = vld [vmem:[%s2 + $0x70] sm:$0xff]
      %v651 = vld [vmem:[%s2 + $0x78] sm:$0xff]
      %v652 = vld [vmem:[%s2 + $0x80] sm:$0xff]
      %v653 = vld [vmem:[%s2 + $0x88] sm:$0xff]
      %v654 = vld [vmem:[%s2 + $0x90] sm:$0xff]
      %v655 = vld [vmem:[%s2 + $0x98] sm:$0xff]
      %v656 = vld [vmem:[%s2 + $0xa0] sm:$0xff]
      %v657 = vld [vmem:[%s2 + $0xa8] sm:$0xff]
      %v658 = vld [vmem:[%s2 + $0xb0] sm:$0xff]
      %v659 = vld [vmem:[%s2 + $0xb8] sm:$0xff]
      %v660 = vld [vmem:[%s2 + $0xc0] sm:$0xff]
      %v661 = vld [vmem:[%s2 + $0xc8] sm:$0xff]
      %v662 = vld [vmem:[%s2 + $0xd0] sm:$0xff]
      %v663 = vld [vmem:[%s2 + $0xd8] sm:$0xff]
      %v664 = vld [vmem:[%s2 + $0xe0] sm:$0xff]
      %v665 = vld [vmem:[%s2 + $0xe8] sm:$0xff]
      %v666 = vld [vmem:[%s2 + $0xf0] sm:$0xff]
      %v667 = vld [vmem:[%s2 + $0xf8] sm:$0xff]
      %v668 = vld [vmem:[%s2 + $0x100] sm:$0xff]
      %v669 = vld [vmem:[%s2 + $0x108] sm:$0xff]
      %v670 = vld [vmem:[%s2 + $0x110] sm:$0xff]
      %v671 = vld [vmem:[%s2 + $0x118] sm:$0xff]
      %v672 = vld [vmem:[%s2 + $0x120] sm:$0xff]
      %v673 = vld [vmem:[%s2 + $0x128] sm:$0xff]
      %v674 = vld [vmem:[%s2 + $0x130] sm:$0xff]
      %v675 = vld [vmem:[%s2 + $0x138] sm:$0xff]
      %v676 = vld [vmem:[%s2 + $0x140] sm:$0xff]
      %v677 = vld [vmem:[%s2 + $0x148] sm:$0xff]
      %v678 = vld [vmem:[%s2 + $0x150] sm:$0xff]
      %v679 = vld [vmem:[%s2 + $0x158] sm:$0xff]
      %v680 = vld [vmem:[%s2 + $0x160] sm:$0xff]
      %v681 = vld [vmem:[%s2 + $0x168] sm:$0xff]
      %v682 = vld [vmem:[%s2 + $0x170] sm:$0xff]
      %v683 = vld [vmem:[%s2 + $0x178] sm:$0xff]
      %v684 = vld [vmem:[%s2 + $0x180] sm:$0xff]
      %v685 = vld [vmem:[%s2 + $0x188] sm:$0xff]
      %v686 = vld [vmem:[%s2 + $0x190] sm:$0xff]
      %v687 = vld [vmem:[%s2 + $0x198] sm:$0xff]
      %v688 = vld [vmem:[%s2 + $0x1a0] sm:$0xff]
      %v689 = vld [vmem:[%s2 + $0x1a8] sm:$0xff]
      %v690 = vld [vmem:[%s2 + $0x1b0] sm:$0xff]
      %v691 = vld [vmem:[%s2 + $0x1b8] sm:$0xff]
      %v692 = vld [vmem:[%s2 + $0x1c0] sm:$0xff]
      %v693 = vld [vmem:[%s2 + $0x1c8] sm:$0xff]
      %v694 = vld [vmem:[%s2 + $0x1d0] sm:$0xff]
      %v695 = vld [vmem:[%s2 + $0x1d8] sm:$0xff]
      %v696 = vld [vmem:[%s2 + $0x1e0] sm:$0xff]
      %v697 = vld [vmem:[%s2 + $0x1e8] sm:$0xff]
      %v698 = vld [vmem:[%s2 + $0x1f0] sm:$0xff]
      %v699 = vld [vmem:[%s2 + $0x1f8] sm:$0xff]
      %v700 = vld [vmem:[%s2 + $0x200] sm:$0xff]
      %v701 = vld [vmem:[%s2 + $0x208] sm:$0xff]
      %v702 = vld [vmem:[%s2 + $0x210] sm:$0xff]
      %v703 = vld [vmem:[%s2 + $0x218] sm:$0xff]
      %v704 = vld [vmem:[%s2 + $0x220] sm:$0xff]
      %v705 = vld [vmem:[%s2 + $0x228] sm:$0xff]
      %v706 = vld [vmem:[%s2 + $0x230] sm:$0xff]
      %v707 = vld [vmem:[%s2 + $0x238] sm:$0xff]
      %v708 = vld [vmem:[%s2 + $0x240] sm:$0xff]
      %v709 = vld [vmem:[%s2 + $0x248] sm:$0xff]
      %v710 = vld [vmem:[%s2 + $0x250] sm:$0xff]
      %v711 = vld [vmem:[%s2 + $0x258] sm:$0xff]
      %v712 = vld [vmem:[%s2 + $0x260] sm:$0xff]
      %v713 = vld [vmem:[%s2 + $0x268] sm:$0xff]
      %v714 = vld [vmem:[%s2 + $0x270] sm:$0xff]
      %v715 = vld [vmem:[%s2 + $0x278] sm:$0xff]
      %v716 = vld [vmem:[%s2 + $0x280] sm:$0xff]
      %v717 = vld [vmem:[%s2 + $0x288] sm:$0xff]
      %v718 = vld [vmem:[%s2 + $0x290] sm:$0xff]
      %v719 = vld [vmem:[%s2 + $0x298] sm:$0xff]
      %v720 = vld [vmem:[%s2 + $0x2a0] sm:$0xff]
      %v721 = vld [vmem:[%s2 + $0x2a8] sm:$0xff]
      %v722 = vld [vmem:[%s2 + $0x2b0] sm:$0xff]
      %v723 = vld [vmem:[%s2 + $0x2b8] sm:$0xff]
      %v724 = vld [vmem:[%s2 + $0x2c0] sm:$0xff]
      %v725 = vld [vmem:[%s2 + $0x2c8] sm:$0xff]
      %v726 = vld [vmem:[%s2 + $0x2d0] sm:$0xff]
      %v727 = vld [vmem:[%s2 + $0x2d8] sm:$0xff]
      %v728 = vld [vmem:[%s2 + $0x2e0] sm:$0xff]
      %v729 = vld [vmem:[%s2 + $0x2e8] sm:$0xff]
      %v730 = vld [vmem:[%s2 + $0x2f0] sm:$0xff]
      %v731 = vld [vmem:[%s2 + $0x2f8] sm:$0xff]
      %v732 = vld [vmem:[%s2 + $0x300] sm:$0xff]
      %v733 = vld [vmem:[%s2 + $0x308] sm:$0xff]
      %v734 = vld [vmem:[%s2 + $0x310] sm:$0xff]
      %v735 = vld [vmem:[%s2 + $0x318] sm:$0xff]
      %v736 = vld [vmem:[%s2 + $0x320] sm:$0xff]
      %v737 = vld [vmem:[%s2 + $0x328] sm:$0xff]
      %v738 = vld [vmem:[%s2 + $0x330] sm:$0xff]
      %v739 = vld [vmem:[%s2 + $0x338] sm:$0xff]
      %v740 = vld [vmem:[%s2 + $0x340] sm:$0xff]
      %v741 = vld [vmem:[%s2 + $0x348] sm:$0xff]
      %v742 = vld [vmem:[%s2 + $0x350] sm:$0xff]
      %v743 = vld [vmem:[%s2 + $0x358] sm:$0xff]
      %v744 = vld [vmem:[%s2 + $0x360] sm:$0xff]
      %v745 = vld [vmem:[%s2 + $0x368] sm:$0xff]
      %v746 = vld [vmem:[%s2 + $0x370] sm:$0xff]
      %v747 = vld [vmem:[%s2 + $0x378] sm:$0xff]
      %v748 = vld [vmem:[%s2 + $0x380] sm:$0xff]
      %v749 = vld [vmem:[%s2 + $0x388] sm:$0xff]
      %v750 = vld [vmem:[%s2 + $0x390] sm:$0xff]
      %v751 = vld [vmem:[%s2 + $0x398] sm:$0xff]
      %v752 = vld [vmem:[%s2 + $0x3a0] sm:$0xff]
      %v753 = vld [vmem:[%s2 + $0x3a8] sm:$0xff]
      %v754 = vld [vmem:[%s2 + $0x3b0] sm:$0xff]
      %v755 = vld [vmem:[%s2 + $0x3b8] sm:$0xff]
      %v756 = vld [vmem:[%s2 + $0x3c0] sm:$0xff]
      %v757 = vld [vmem:[%s2 + $0x3c8] sm:$0xff]
      %v758 = vld [vmem:[%s2 + $0x3d0] sm:$0xff]
      %v759 = vld [vmem:[%s2 + $0x3d8] sm:$0xff]
      %v760 = vld [vmem:[%s2 + $0x3e0] sm:$0xff]
      %v761 = vld [vmem:[%s2 + $0x3e8] sm:$0xff]
      %v762 = vld [vmem:[%s2 + $0x3f0] sm:$0xff]
      %v763 = vld [vmem:[%s2 + $0x3f8] sm:$0xff]
      %v764 = vld [vmem:[%s2 + $0x400] sm:$0xff]
      %v765 = vld [vmem:[%s2 + $0x408] sm:$0xff]
      %v766 = vld [vmem:[%s2 + $0x410] sm:$0xff]
      %v767 = vld [vmem:[%s2 + $0x418] sm:$0xff]
      %v768 = vld [vmem:[%s2 + $0x420] sm:$0xff]
      %v769 = vld [vmem:[%s2 + $0x428] sm:$0xff]
      %v770 = vld [vmem:[%s2 + $0x430] sm:$0xff]
      %v771 = vld [vmem:[%s2 + $0x438] sm:$0xff]
      %v772 = vld [vmem:[%s2 + $0x440] sm:$0xff]
      %v773 = vld [vmem:[%s2 + $0x448] sm:$0xff]
      %v774 = vld [vmem:[%s2 + $0x450] sm:$0xff]
      %v775 = vld [vmem:[%s2 + $0x458] sm:$0xff]
      %v776 = vld [vmem:[%s2 + $0x460] sm:$0xff]
      %v777 = vld [vmem:[%s2 + $0x468] sm:$0xff]
      %v778 = vld [vmem:[%s2 + $0x470] sm:$0xff]
      %v779 = vld [vmem:[%s2 + $0x478] sm:$0xff]
      %v780 = vld [vmem:[%s2 + $0x480] sm:$0xff]
      %v781 = vld [vmem:[%s2 + $0x488] sm:$0xff]
      %v782 = vld [vmem:[%s2 + $0x490] sm:$0xff]
      %v783 = vld [vmem:[%s2 + $0x498] sm:$0xff]
      %v784 = vld [vmem:[%s2 + $0x4a0] sm:$0xff]
      %v785 = vld [vmem:[%s2 + $0x4a8] sm:$0xff]
      %v786 = vld [vmem:[%s2 + $0x4b0] sm:$0xff]
      %v787 = vld [vmem:[%s2 + $0x4b8] sm:$0xff]
      %v788 = vld [vmem:[%s2 + $0x4c0] sm:$0xff]
      %v789 = vld [vmem:[%s2 + $0x4c8] sm:$0xff]
      %v790 = vld [vmem:[%s2 + $0x4d0] sm:$0xff]
      %v791 = vld [vmem:[%s2 + $0x4d8] sm:$0xff]
      %v792 = vld [vmem:[%s2 + $0x4e0] sm:$0xff]
      %v793 = vld [vmem:[%s2 + $0x4e8] sm:$0xff]
      %v794 = vld [vmem:[%s2 + $0x4f0] sm:$0xff]
      %v795 = vld [vmem:[%s2 + $0x4f8] sm:$0xff]
      %v796 = vld [vmem:[%s2 + $0x500] sm:$0xff]
      %v797 = vld [vmem:[%s2 + $0x508] sm:$0xff]
      %v798 = vld [vmem:[%s2 + $0x510] sm:$0xff]
      %v799 = vld [vmem:[%s2 + $0x518] sm:$0xff]
      %v800 = vld [vmem:[%s2 + $0x520] sm:$0xff]
      %v801 = vld [vmem:[%s2 + $0x528] sm:$0xff]
      %v802 = vld [vmem:[%s2 + $0x530] sm:$0xff]
      %v803 = vld [vmem:[%s2 + $0x538] sm:$0xff]
      %v804 = vld [vmem:[%s2 + $0x540] sm:$0xff]
      %v805 = vld [vmem:[%s2 + $0x548] sm:$0xff]
      %v806 = vld [vmem:[%s2 + $0x550] sm:$0xff]
      %v807 = vld [vmem:[%s2 + $0x558] sm:$0xff]
      %v808 = vld [vmem:[%s2 + $0x560] sm:$0xff]
      %v809 = vld [vmem:[%s2 + $0x568] sm:$0xff]
      %v810 = vld [vmem:[%s2 + $0x570] sm:$0xff]
      %v811 = vld [vmem:[%s2 + $0x578] sm:$0xff]
      %v812 = vld [vmem:[%s2 + $0x580] sm:$0xff]
      %v813 = vld [vmem:[%s2 + $0x588] sm:$0xff]
      %v814 = vld [vmem:[%s2 + $0x590] sm:$0xff]
      %v815 = vld [vmem:[%s2 + $0x598] sm:$0xff]
      %v816 = vld [vmem:[%s2 + $0x5a0] sm:$0xff]
      %v817 = vld [vmem:[%s2 + $0x5a8] sm:$0xff]
      %v818 = vld [vmem:[%s2 + $0x5b0] sm:$0xff]
      %v819 = vld [vmem:[%s2 + $0x5b8] sm:$0xff]
      %v820 = vld [vmem:[%s2 + $0x5c0] sm:$0xff]
      %v821 = vld [vmem:[%s2 + $0x5c8] sm:$0xff]
      %v822 = vld [vmem:[%s2 + $0x5d0] sm:$0xff]
      %v823 = vld [vmem:[%s2 + $0x5d8] sm:$0xff]
      %v824 = vld [vmem:[%s2 + $0x5e0] sm:$0xff]
      %v825 = vld [vmem:[%s2 + $0x5e8] sm:$0xff]
      %v826 = vld [vmem:[%s2 + $0x5f0] sm:$0xff]
      %v827 = vld [vmem:[%s2 + $0x5f8] sm:$0xff]
      %v828 = vld [vmem:[%s2 + $0x600] sm:$0xff]
      %v829 = vld [vmem:[%s2 + $0x608] sm:$0xff]
      %v830 = vld [vmem:[%s2 + $0x610] sm:$0xff]
      %v831 = vld [vmem:[%s2 + $0x618] sm:$0xff]
      %v832 = vld [vmem:[%s2 + $0x620] sm:$0xff]
      %v833 = vld [vmem:[%s2 + $0x628] sm:$0xff]
      %v834 = vld [vmem:[%s2 + $0x630] sm:$0xff]
      %v835 = vld [vmem:[%s2 + $0x638] sm:$0xff]
      %v836 = vld [vmem:[%s2 + $0x640] sm:$0xff]
      %v837 = vld [vmem:[%s2 + $0x648] sm:$0xff]
      %v838 = vld [vmem:[%s2 + $0x650] sm:$0xff]
      %v839 = vld [vmem:[%s2 + $0x658] sm:$0xff]
      %v840 = vld [vmem:[%s2 + $0x660] sm:$0xff]
      %v841 = vld [vmem:[%s2 + $0x668] sm:$0xff]
      %v842 = vld [vmem:[%s2 + $0x670] sm:$0xff]
      %v843 = vld [vmem:[%s2 + $0x678] sm:$0xff]
      %v844 = vld [vmem:[%s2 + $0x680] sm:$0xff]
      %v845 = vld [vmem:[%s2 + $0x688] sm:$0xff]
      %v846 = vld [vmem:[%s2 + $0x690] sm:$0xff]
      %v847 = vld [vmem:[%s2 + $0x698] sm:$0xff]
      %v848 = vld [vmem:[%s2 + $0x6a0] sm:$0xff]
      %v849 = vld [vmem:[%s2 + $0x6a8] sm:$0xff]
      %v850 = vld [vmem:[%s2 + $0x6b0] sm:$0xff]
      %v851 = vld [vmem:[%s2 + $0x6b8] sm:$0xff]
      %v852 = vld [vmem:[%s2 + $0x6c0] sm:$0xff]
      %v853 = vld [vmem:[%s2 + $0x6c8] sm:$0xff]
      %v854 = vld [vmem:[%s2 + $0x6d0] sm:$0xff]
      %v855 = vld [vmem:[%s2 + $0x6d8] sm:$0xff]
      %v856 = vld [vmem:[%s2 + $0x6e0] sm:$0xff]
      %v857 = vld [vmem:[%s2 + $0x6e8] sm:$0xff]
      %v858 = vld [vmem:[%s2 + $0x6f0] sm:$0xff]
      %v859 = vld [vmem:[%s2 + $0x6f8] sm:$0xff]
      %v860 = vld [vmem:[%s2 + $0x700] sm:$0xff]
      %v861 = vld [vmem:[%s2 + $0x708] sm:$0xff]
      %v862 = vld [vmem:[%s2 + $0x710] sm:$0xff]
      %v863 = vld [vmem:[%s2 + $0x718] sm:$0xff]
      %v864 = vld [vmem:[%s2 + $0x720] sm:$0xff]
      %v865 = vld [vmem:[%s2 + $0x728] sm:$0xff]
      %v866 = vld [vmem:[%s2 + $0x730] sm:$0xff]
      %v867 = vld [vmem:[%s2 + $0x738] sm:$0xff]
      %v868 = vld [vmem:[%s2 + $0x740] sm:$0xff]
      %v869 = vld [vmem:[%s2 + $0x748] sm:$0xff]
      %v870 = vld [vmem:[%s2 + $0x750] sm:$0xff]
      %v871 = vld [vmem:[%s2 + $0x758] sm:$0xff]
      %v872 = vld [vmem:[%s2 + $0x760] sm:$0xff]
      %v873 = vld [vmem:[%s2 + $0x768] sm:$0xff]
      %v874 = vld [vmem:[%s2 + $0x770] sm:$0xff]
      %v875 = vld [vmem:[%s2 + $0x778] sm:$0xff]
      %v876 = vld [vmem:[%s2 + $0x780] sm:$0xff]
      %v877 = vld [vmem:[%s2 + $0x788] sm:$0xff]
      %v878 = vld [vmem:[%s2 + $0x790] sm:$0xff]
      %v879 = vld [vmem:[%s2 + $0x798] sm:$0xff]
      %v880 = vld [vmem:[%s2 + $0x7a0] sm:$0xff]
      %v881 = vld [vmem:[%s2 + $0x7a8] sm:$0xff]
      %v882 = vld [vmem:[%s2 + $0x7b0] sm:$0xff]
      %v883 = vld [vmem:[%s2 + $0x7b8] sm:$0xff]
      %v884 = vld [vmem:[%s2 + $0x7c0] sm:$0xff]
      %v885 = vld [vmem:[%s2 + $0x7c8] sm:$0xff]
      %v886 = vld [vmem:[%s2 + $0x7d0] sm:$0xff]
      %v887 = vld [vmem:[%s2 + $0x7d8] sm:$0xff]
      %v888 = vld [vmem:[%s2 + $0x7e0] sm:$0xff]
      %v889 = vld [vmem:[%s2 + $0x7e8] sm:$0xff]
      %v890 = vld [vmem:[%s2 + $0x7f0] sm:$0xff]
      %v891 = vld [vmem:[%s2 + $0x7f8] sm:$0xff]
      %v892 = vld [vmem:[%s2 + $0x800] sm:$0xff]
      %v893 = vld [vmem:[%s2 + $0x808] sm:$0xff]
      %v894 = vld [vmem:[%s2 + $0x810] sm:$0xff]
      %v895 = vld [vmem:[%s2 + $0x818] sm:$0xff]
      %v896 = vld [vmem:[%s2 + $0x820] sm:$0xff]
      %v897 = vld [vmem:[%s2 + $0x828] sm:$0xff]
      %v898 = vld [vmem:[%s2 + $0x830] sm:$0xff]
      %v899 = vld [vmem:[%s2 + $0x838] sm:$0xff]
      %v900 = vld [vmem:[%s2 + $0x840] sm:$0xff]
      %v901 = vld [vmem:[%s2 + $0x848] sm:$0xff]
      %v902 = vld [vmem:[%s2 + $0x850] sm:$0xff]
      %v903 = vld [vmem:[%s2 + $0x858] sm:$0xff]
      %v904 = vld [vmem:[%s2 + $0x860] sm:$0xff]
      %v905 = vld [vmem:[%s2 + $0x868] sm:$0xff]
      %v906 = vld [vmem:[%s2 + $0x870] sm:$0xff]
      %v907 = vld [vmem:[%s2 + $0x878] sm:$0xff]
      %v908 = vld [vmem:[%s2 + $0x880] sm:$0xff]
      %v909 = vld [vmem:[%s2 + $0x888] sm:$0xff]
      %v910 = vld [vmem:[%s2 + $0x890] sm:$0xff]
      %v911 = vld [vmem:[%s2 + $0x898] sm:$0xff]
      %v912 = vld [vmem:[%s2 + $0x8a0] sm:$0xff]
      %v913 = vld [vmem:[%s2 + $0x8a8] sm:$0xff]
      %v914 = vld [vmem:[%s2 + $0x8b0] sm:$0xff]
      %v915 = vld [vmem:[%s2 + $0x8b8] sm:$0xff]
      %v916 = vld [vmem:[%s2 + $0x8c0] sm:$0xff]
      %v917 = vld [vmem:[%s2 + $0x8c8] sm:$0xff]
      %v918 = vld [vmem:[%s2 + $0x8d0] sm:$0xff]
      %v919 = vld [vmem:[%s2 + $0x8d8] sm:$0xff]
      %v920 = vld [vmem:[%s2 + $0x8e0] sm:$0xff]
      %v921 = vld [vmem:[%s2 + $0x8e8] sm:$0xff]
      %v922 = vld [vmem:[%s2 + $0x8f0] sm:$0xff]
      %v923 = vld [vmem:[%s2 + $0x8f8] sm:$0xff]
      %v924 = vld [vmem:[%s2 + $0x900] sm:$0xff]
      %v925 = vld [vmem:[%s2 + $0x908] sm:$0xff]
      %v926 = vld [vmem:[%s2 + $0x910] sm:$0xff]
      %v927 = vld [vmem:[%s2 + $0x918] sm:$0xff]
      %v928 = vld [vmem:[%s2 + $0x920] sm:$0xff]
      %v929 = vld [vmem:[%s2 + $0x928] sm:$0xff]
      %v930 = vld [vmem:[%s2 + $0x930] sm:$0xff]
      %v931 = vld [vmem:[%s2 + $0x938] sm:$0xff]
      %v932 = vld [vmem:[%s2 + $0x940] sm:$0xff]
      %v933 = vld [vmem:[%s2 + $0x948] sm:$0xff]
      %v934 = vld [vmem:[%s2 + $0x950] sm:$0xff]
      %v935 = vld [vmem:[%s2 + $0x958] sm:$0xff]
      %v936 = vld [vmem:[%s2 + $0x960] sm:$0xff]
      %v937 = vld [vmem:[%s2 + $0x968] sm:$0xff]
      %v938 = vld [vmem:[%s2 + $0x970] sm:$0xff]
      %v939 = vld [vmem:[%s2 + $0x978] sm:$0xff]
      %v940 = vld [vmem:[%s2 + $0x980] sm:$0xff]
      %v941 = vld [vmem:[%s2 + $0x988] sm:$0xff]
      %v942 = vld [vmem:[%s2 + $0x990] sm:$0xff]
      %v943 = vld [vmem:[%s2 + $0x998] sm:$0xff]
      %v944 = vld [vmem:[%s2 + $0x9a0] sm:$0xff]
      %v945 = vld [vmem:[%s2 + $0x9a8] sm:$0xff]
      %v946 = vld [vmem:[%s2 + $0x9b0] sm:$0xff]
      %v947 = vld [vmem:[%s2 + $0x9b8] sm:$0xff]
      %v948 = vld [vmem:[%s2 + $0x9c0] sm:$0xff]
      %v949 = vld [vmem:[%s2 + $0x9c8] sm:$0xff]
      %v950 = vld [vmem:[%s2 + $0x9d0] sm:$0xff]
      %v951 = vld [vmem:[%s2 + $0x9d8] sm:$0xff]
      %v952 = vld [vmem:[%s2 + $0x9e0] sm:$0xff]
      %v953 = vld [vmem:[%s2 + $0x9e8] sm:$0xff]
      %v954 = vld [vmem:[%s2 + $0x9f0] sm:$0xff]
      %v955 = vld [vmem:[%s2 + $0x9f8] sm:$0xff]
      %v956 = vld [vmem:[%s2 + $0xa00] sm:$0xff]
      %v957 = vld [vmem:[%s2 + $0xa08] sm:$0xff]
      %v958 = vld [vmem:[%s2 + $0xa10] sm:$0xff]
      %v959 = vld [vmem:[%s2 + $0xa18] sm:$0xff]
      %v960 = vld [vmem:[%s2 + $0xa20] sm:$0xff]
      %v961 = vld [vmem:[%s2 + $0xa28] sm:$0xff]
      %v962 = vld [vmem:[%s2 + $0xa30] sm:$0xff]
      %v963 = vld [vmem:[%s2 + $0xa38] sm:$0xff]
      %v964 = vld [vmem:[%s2 + $0xa40] sm:$0xff]
      %v965 = vld [vmem:[%s2 + $0xa48] sm:$0xff]
      %v966 = vld [vmem:[%s2 + $0xa50] sm:$0xff]
      %v967 = vld [vmem:[%s2 + $0xa58] sm:$0xff]
      %v968 = vld [vmem:[%s2 + $0xa60] sm:$0xff]
      %v969 = vld [vmem:[%s2 + $0xa68] sm:$0xff]
      %v970 = vld [vmem:[%s2 + $0xa70] sm:$0xff]
      %v971 = vld [vmem:[%s2 + $0xa78] sm:$0xff]
      %v972 = vpack.c.bf16 %v638, %v636
      %v973 = vpack.c.bf16 %v639, %v637
      %v974 = vpack.c.bf16 %v642, %v640
      %v975 = vpack.c.bf16 %v643, %v641
      %v976 = vpack.c.bf16 %v646, %v644
      %v977 = vpack.c.bf16 %v647, %v645
      %v978 = vpack.c.bf16 %v650, %v648
      %v979 = vpack.c.bf16 %v651, %v649
      %v980 = vpack.c.bf16 %v654, %v652
      %v981 = vpack.c.bf16 %v655, %v653
      %v982 = vpack.c.bf16 %v658, %v656
      %v983 = vpack.c.bf16 %v659, %v657
      %v984 = vpack.c.bf16 %v662, %v660
      %v985 = vpack.c.bf16 %v663, %v661
      %v986 = vpack.c.bf16 %v666, %v664
      %v987 = vpack.c.bf16 %v667, %v665
      %v988 = vpack.c.bf16 %v670, %v668
      %v989 = vpack.c.bf16 %v671, %v669
      %v990 = vpack.c.bf16 %v674, %v672
      %v991 = vpack.c.bf16 %v675, %v673
      %v992 = vpack.c.bf16 %v678, %v676
      %v993 = vpack.c.bf16 %v679, %v677
      %v994 = vpack.c.bf16 %v682, %v680
      %v995 = vpack.c.bf16 %v683, %v681
      %v996 = vpack.c.bf16 %v686, %v684
      %v997 = vpack.c.bf16 %v687, %v685
      %v998 = vpack.c.bf16 %v690, %v688
      %v999 = vpack.c.bf16 %v691, %v689
      %v1000 = vpack.c.bf16 %v694, %v692
      %v1001 = vpack.c.bf16 %v695, %v693
      %v1002 = vpack.c.bf16 %v698, %v696
      %v1003 = vpack.c.bf16 %v699, %v697
      %v1004 = vpack.c.bf16 %v702, %v700
      %v1005 = vpack.c.bf16 %v703, %v701
      %v1006 = vpack.c.bf16 %v706, %v704
      %v1007 = vpack.c.bf16 %v707, %v705
      %v1008 = vpack.c.bf16 %v710, %v708
      %v1009 = vpack.c.bf16 %v711, %v709
      %v1010 = vpack.c.bf16 %v714, %v712
      %v1011 = vpack.c.bf16 %v715, %v713
      %v1012 = vpack.c.bf16 %v718, %v716
      %v1013 = vpack.c.bf16 %v719, %v717
      %v1014 = vpack.c.bf16 %v722, %v720
      %v1015 = vpack.c.bf16 %v723, %v721
      %v1016 = vpack.c.bf16 %v726, %v724
      %v1017 = vpack.c.bf16 %v727, %v725
      %v1018 = vpack.c.bf16 %v730, %v728
      %v1019 = vpack.c.bf16 %v731, %v729
      %v1020 = vpack.c.bf16 %v734, %v732
      %v1021 = vpack.c.bf16 %v735, %v733
      %v1022 = vpack.c.bf16 %v738, %v736
      %v1023 = vpack.c.bf16 %v739, %v737
      %v1024 = vpack.c.bf16 %v742, %v740
      %v1025 = vpack.c.bf16 %v743, %v741
      %v1026 = vpack.c.bf16 %v746, %v744
      %v1027 = vpack.c.bf16 %v747, %v745
      %v1028 = vpack.c.bf16 %v750, %v748
      %v1029 = vpack.c.bf16 %v751, %v749
      %v1030 = vpack.c.bf16 %v754, %v752
      %v1031 = vpack.c.bf16 %v755, %v753
      %v1032 = vpack.c.bf16 %v758, %v756
      %v1033 = vpack.c.bf16 %v759, %v757
      %v1034 = vpack.c.bf16 %v762, %v760
      %v1035 = vpack.c.bf16 %v763, %v761
      %v1036 = vpack.c.bf16 %v766, %v764
      %v1037 = vpack.c.bf16 %v767, %v765
      %v1038 = vpack.c.bf16 %v770, %v768
      %v1039 = vpack.c.bf16 %v771, %v769
      %v1040 = vpack.c.bf16 %v774, %v772
      %v1041 = vpack.c.bf16 %v775, %v773
      %v1042 = vpack.c.bf16 %v778, %v776
      %v1043 = vpack.c.bf16 %v779, %v777
      %v1044 = vpack.c.bf16 %v782, %v780
      %v1045 = vpack.c.bf16 %v783, %v781
      %v1046 = vpack.c.bf16 %v786, %v784
      %v1047 = vpack.c.bf16 %v787, %v785
      %v1048 = vpack.c.bf16 %v790, %v788
      %v1049 = vpack.c.bf16 %v791, %v789
      %v1050 = vpack.c.bf16 %v794, %v792
      %v1051 = vpack.c.bf16 %v795, %v793
      %v1052 = vpack.c.bf16 %v798, %v796
      %v1053 = vpack.c.bf16 %v799, %v797
      %v1054 = vpack.c.bf16 %v802, %v800
      %v1055 = vpack.c.bf16 %v803, %v801
      %v1056 = vpack.c.bf16 %v806, %v804
      %v1057 = vpack.c.bf16 %v807, %v805
      %v1058 = vpack.c.bf16 %v810, %v808
      %v1059 = vpack.c.bf16 %v811, %v809
      %v1060 = vpack.c.bf16 %v814, %v812
      %v1061 = vpack.c.bf16 %v815, %v813
      %v1062 = vpack.c.bf16 %v818, %v816
      %v1063 = vpack.c.bf16 %v819, %v817
      %v1064 = vpack.c.bf16 %v822, %v820
      %v1065 = vpack.c.bf16 %v823, %v821
      %v1066 = vpack.c.bf16 %v826, %v824
      %v1067 = vpack.c.bf16 %v827, %v825
      %v1068 = vpack.c.bf16 %v830, %v828
      %v1069 = vpack.c.bf16 %v831, %v829
      %v1070 = vpack.c.bf16 %v834, %v832
      %v1071 = vpack.c.bf16 %v835, %v833
      %v1072 = vpack.c.bf16 %v838, %v836
      %v1073 = vpack.c.bf16 %v839, %v837
      %v1074 = vpack.c.bf16 %v842, %v840
      %v1075 = vpack.c.bf16 %v843, %v841
      %v1076 = vpack.c.bf16 %v846, %v844
      %v1077 = vpack.c.bf16 %v847, %v845
      %v1078 = vpack.c.bf16 %v850, %v848
      %v1079 = vpack.c.bf16 %v851, %v849
      %v1080 = vpack.c.bf16 %v854, %v852
      %v1081 = vpack.c.bf16 %v855, %v853
      %v1082 = vpack.c.bf16 %v858, %v856
      %v1083 = vpack.c.bf16 %v859, %v857
      %v1084 = vpack.c.bf16 %v862, %v860
      %v1085 = vpack.c.bf16 %v863, %v861
      %v1086 = vpack.c.bf16 %v866, %v864
      %v1087 = vpack.c.bf16 %v867, %v865
      %v1088 = vpack.c.bf16 %v870, %v868
      %v1089 = vpack.c.bf16 %v871, %v869
      %v1090 = vpack.c.bf16 %v874, %v872
      %v1091 = vpack.c.bf16 %v875, %v873
      %v1092 = vpack.c.bf16 %v878, %v876
      %v1093 = vpack.c.bf16 %v879, %v877
      %v1094 = vpack.c.bf16 %v882, %v880
      %v1095 = vpack.c.bf16 %v883, %v881
      %v1096 = vpack.c.bf16 %v886, %v884
      %v1097 = vpack.c.bf16 %v887, %v885
      %v1098 = vpack.c.bf16 %v890, %v888
      %v1099 = vpack.c.bf16 %v891, %v889
      %v1100 = vpack.c.bf16 %v894, %v892
      %v1101 = vpack.c.bf16 %v895, %v893
      %v1102 = vpack.c.bf16 %v898, %v896
      %v1103 = vpack.c.bf16 %v899, %v897
      %v1104 = vpack.c.bf16 %v902, %v900
      %v1105 = vpack.c.bf16 %v903, %v901
      %v1106 = vpack.c.bf16 %v906, %v904
      %v1107 = vpack.c.bf16 %v907, %v905
      %v1108 = vpack.c.bf16 %v910, %v908
      %v1109 = vpack.c.bf16 %v911, %v909
      %v1110 = vpack.c.bf16 %v914, %v912
      %v1111 = vpack.c.bf16 %v915, %v913
      %v1112 = vpack.c.bf16 %v918, %v916
      %v1113 = vpack.c.bf16 %v919, %v917
      %v1114 = vpack.c.bf16 %v922, %v920
      %v1115 = vpack.c.bf16 %v923, %v921
      %v1116 = vpack.c.bf16 %v926, %v924
      %v1117 = vpack.c.bf16 %v927, %v925
      %v1118 = vpack.c.bf16 %v930, %v928
      %v1119 = vpack.c.bf16 %v931, %v929
      %v1120 = vpack.c.bf16 %v934, %v932
      %v1121 = vpack.c.bf16 %v935, %v933
      %v1122 = vpack.c.bf16 %v938, %v936
      %v1123 = vpack.c.bf16 %v939, %v937
      %v1124 = vpack.c.bf16 %v942, %v940
      %v1125 = vpack.c.bf16 %v943, %v941
      %v1126 = vpack.c.bf16 %v946, %v944
      %v1127 = vpack.c.bf16 %v947, %v945
      %v1128 = vpack.c.bf16 %v950, %v948
      %v1129 = vpack.c.bf16 %v951, %v949
      %v1130 = vpack.c.bf16 %v954, %v952
      %v1131 = vpack.c.bf16 %v955, %v953
      %v1132 = vpack.c.bf16 %v958, %v956
      %v1133 = vpack.c.bf16 %v959, %v957
      %v1134 = vpack.c.bf16 %v962, %v960
      %v1135 = vpack.c.bf16 %v963, %v961
      %v1136 = vpack.c.bf16 %v966, %v964
      %v1137 = vpack.c.bf16 %v967, %v965
      %v1138 = vpack.c.bf16 %v970, %v968
      %v1139 = vpack.c.bf16 %v971, %v969
      %vm1140 = vcmask 523264
      %v1142 = vsel %vm1140, %v569, 0
      %v1145 = vsel %vm1140, %v580, 0
      %v1148 = vsel %vm1140, %v591, 0
      %v1151 = vsel %vm1140, %v602, 0
      %v1154 = vsel %vm1140, %v613, 0
      %v1157 = vsel %vm1140, %v624, 0
      %v1160 = vsel %vm1140, %v635, 0
      %1162 = vmatprep.subr.bf16.mxu0 %v987
      %1163 = vmatpush1.bf16.msra.mxu0 %v986
      %1164 = vmatprep.subr.bf16.mxu0 %v985
      %1165 = vmatpush1.bf16.msra.mxu0 %v984
      %1166 = vmatprep.subr.bf16.mxu0 %v983
      %1167 = vmatpush1.bf16.msra.mxu0 %v982
      %1168 = vmatprep.subr.bf16.mxu0 %v981
      %1169 = vmatpush1.bf16.msra.mxu0 %v980
      %1170 = vmatprep.subr.bf16.mxu0 %v979
      %1171 = vmatpush1.bf16.msra.mxu0 %v978
      %1172 = vmatprep.subr.bf16.mxu0 %v977
      %1173 = vmatpush1.bf16.msra.mxu0 %v976
      %1174 = vmatprep.subr.bf16.mxu0 %v975
      %1175 = vmatpush1.bf16.msra.mxu0 %v974
      %1176 = vmatprep.subr.bf16.mxu0 %v973
      %1177 = vmatpush1.bf16.msra.mxu0 %v972
      %1178 = vmatprep.subr.bf16.mxu0 %v1003
      %1179 = vmatpush2.bf16.msra.mxu0 %v1002
      %1180 = vmatprep.subr.bf16.mxu0 %v1001
      %1181 = vmatpush2.bf16.msra.mxu0 %v1000
      %1182 = vmatprep.subr.bf16.mxu0 %v999
      %1183 = vmatpush2.bf16.msra.mxu0 %v998
      %1184 = vmatprep.subr.bf16.mxu0 %v997
      %1185 = vmatpush2.bf16.msra.mxu0 %v996
      %1186 = vmatprep.subr.bf16.mxu0 %v995
      %1187 = vmatpush2.bf16.msra.mxu0 %v994
      %1188 = vmatprep.subr.bf16.mxu0 %v993
      %1189 = vmatpush2.bf16.msra.mxu0 %v992
      %1190 = vmatprep.subr.bf16.mxu0 %v991
      %1191 = vmatpush2.bf16.msra.mxu0 %v990
      %1192 = vmatprep.subr.bf16.mxu0 %v989
      %1193 = vmatpush2.bf16.msra.mxu0 %v988
      %1194 = vmatprep.mubr.bf16.mxu0 %v560
      %1195 = vmatmul.mubr.bf16.gmra.mxu0 %v559
      %v1196 = vpop.f32.mrf.mxu0
      %v1197 = vadd.f32 0.0, %v1196
      %v1198 = vpop.f32.mrf.mxu0
      %v1199 = vadd.f32 0.0, %v1198
      %v1200 = vpop.f32.mrf.mxu0
      %v1201 = vadd.f32 0.0, %v1200
      %v1202 = vpop.f32.mrf.mxu0
      %v1203 = vadd.f32 0.0, %v1202
      %1204 = vmatprep.mubr.bf16.mxu0 %v571
      %1205 = vmatmul.mubr.bf16.gmra.mxu0 %v570
      %v1206 = vpop.f32.mrf.mxu0
      %v1207 = vadd.f32 0.0, %v1206
      %v1208 = vpop.f32.mrf.mxu0
      %v1209 = vadd.f32 0.0, %v1208
      %v1210 = vpop.f32.mrf.mxu0
      %v1211 = vadd.f32 0.0, %v1210
      %v1212 = vpop.f32.mrf.mxu0
      %v1213 = vadd.f32 0.0, %v1212
      %1214 = vmatprep.mubr.bf16.mxu0 %v582
      %1215 = vmatmul.mubr.bf16.gmra.mxu0 %v581
      %v1216 = vpop.f32.mrf.mxu0
      %v1217 = vadd.f32 0.0, %v1216
      %v1218 = vpop.f32.mrf.mxu0
      %v1219 = vadd.f32 0.0, %v1218
      %v1220 = vpop.f32.mrf.mxu0
      %v1221 = vadd.f32 0.0, %v1220
      %v1222 = vpop.f32.mrf.mxu0
      %v1223 = vadd.f32 0.0, %v1222
      %1224 = vmatprep.mubr.bf16.mxu0 %v593
      %1225 = vmatmul.mubr.bf16.gmra.mxu0 %v592
      %v1226 = vpop.f32.mrf.mxu0
      %v1227 = vadd.f32 0.0, %v1226
      %v1228 = vpop.f32.mrf.mxu0
      %v1229 = vadd.f32 0.0, %v1228
      %v1230 = vpop.f32.mrf.mxu0
      %v1231 = vadd.f32 0.0, %v1230
      %v1232 = vpop.f32.mrf.mxu0
      %v1233 = vadd.f32 0.0, %v1232
      %1234 = vmatprep.mubr.bf16.mxu0 %v604
      %1235 = vmatmul.mubr.bf16.gmra.mxu0 %v603
      %v1236 = vpop.f32.mrf.mxu0
      %v1237 = vadd.f32 0.0, %v1236
      %v1238 = vpop.f32.mrf.mxu0
      %v1239 = vadd.f32 0.0, %v1238
      %v1240 = vpop.f32.mrf.mxu0
      %v1241 = vadd.f32 0.0, %v1240
      %v1242 = vpop.f32.mrf.mxu0
      %v1243 = vadd.f32 0.0, %v1242
      %1244 = vmatprep.mubr.bf16.mxu0 %v615
      %1245 = vmatmul.mubr.bf16.gmra.mxu0 %v614
      %v1246 = vpop.f32.mrf.mxu0
      %v1247 = vadd.f32 0.0, %v1246
      %v1248 = vpop.f32.mrf.mxu0
      %v1249 = vadd.f32 0.0, %v1248
      %v1250 = vpop.f32.mrf.mxu0
      %v1251 = vadd.f32 0.0, %v1250
      %v1252 = vpop.f32.mrf.mxu0
      %v1253 = vadd.f32 0.0, %v1252
      %1254 = vmatprep.mubr.bf16.mxu0 %v626
      %1255 = vmatmul.mubr.bf16.gmra.mxu0 %v625
      %v1256 = vpop.f32.mrf.mxu0
      %v1257 = vadd.f32 0.0, %v1256
      %v1258 = vpop.f32.mrf.mxu0
      %v1259 = vadd.f32 0.0, %v1258
      %v1260 = vpop.f32.mrf.mxu0
      %v1261 = vadd.f32 0.0, %v1260
      %v1262 = vpop.f32.mrf.mxu0
      %v1263 = vadd.f32 0.0, %v1262
      %1264 = vdwg.mxu0
      %1265 = vmatprep.subr.bf16.mxu0 %v1019
      %1266 = vmatpush1.bf16.msra.mxu0 %v1018
      %1267 = vmatprep.subr.bf16.mxu0 %v1017
      %1268 = vmatpush1.bf16.msra.mxu0 %v1016
      %1269 = vmatprep.subr.bf16.mxu0 %v1015
      %1270 = vmatpush1.bf16.msra.mxu0 %v1014
      %1271 = vmatprep.subr.bf16.mxu0 %v1013
      %1272 = vmatpush1.bf16.msra.mxu0 %v1012
      %1273 = vmatprep.subr.bf16.mxu0 %v1011
      %1274 = vmatpush1.bf16.msra.mxu0 %v1010
      %1275 = vmatprep.subr.bf16.mxu0 %v1009
      %1276 = vmatpush1.bf16.msra.mxu0 %v1008
      %1277 = vmatprep.subr.bf16.mxu0 %v1007
      %1278 = vmatpush1.bf16.msra.mxu0 %v1006
      %1279 = vmatprep.subr.bf16.mxu0 %v1005
      %1280 = vmatpush1.bf16.msra.mxu0 %v1004
      %1281 = vmatprep.subr.bf16.mxu0 %v1035
      %1282 = vmatpush2.bf16.msra.mxu0 %v1034
      %1283 = vmatprep.subr.bf16.mxu0 %v1033
      %1284 = vmatpush2.bf16.msra.mxu0 %v1032
      %1285 = vmatprep.subr.bf16.mxu0 %v1031
      %1286 = vmatpush2.bf16.msra.mxu0 %v1030
      %1287 = vmatprep.subr.bf16.mxu0 %v1029
      %1288 = vmatpush2.bf16.msra.mxu0 %v1028
      %1289 = vmatprep.subr.bf16.mxu0 %v1027
      %1290 = vmatpush2.bf16.msra.mxu0 %v1026
      %1291 = vmatprep.subr.bf16.mxu0 %v1025
      %1292 = vmatpush2.bf16.msra.mxu0 %v1024
      %1293 = vmatprep.subr.bf16.mxu0 %v1023
      %1294 = vmatpush2.bf16.msra.mxu0 %v1022
      %1295 = vmatprep.subr.bf16.mxu0 %v1021
      %1296 = vmatpush2.bf16.msra.mxu0 %v1020
      %1297 = vmatprep.mubr.bf16.mxu0 %v562
      %1298 = vmatmul.mubr.bf16.gmra.mxu0 %v561
      %v1299 = vpop.f32.mrf.mxu0
      %v1300 = vadd.f32 %v1197, %v1299
      %v1301 = vpop.f32.mrf.mxu0
      %v1302 = vadd.f32 %v1199, %v1301
      %v1303 = vpop.f32.mrf.mxu0
      %v1304 = vadd.f32 %v1201, %v1303
      %v1305 = vpop.f32.mrf.mxu0
      %v1306 = vadd.f32 %v1203, %v1305
      %1307 = vmatprep.mubr.bf16.mxu0 %v573
      %1308 = vmatmul.mubr.bf16.gmra.mxu0 %v572
      %v1309 = vpop.f32.mrf.mxu0
      %v1310 = vadd.f32 %v1207, %v1309
      %v1311 = vpop.f32.mrf.mxu0
      %v1312 = vadd.f32 %v1209, %v1311
      %v1313 = vpop.f32.mrf.mxu0
      %v1314 = vadd.f32 %v1211, %v1313
      %v1315 = vpop.f32.mrf.mxu0
      %v1316 = vadd.f32 %v1213, %v1315
      %1317 = vmatprep.mubr.bf16.mxu0 %v584
      %1318 = vmatmul.mubr.bf16.gmra.mxu0 %v583
      %v1319 = vpop.f32.mrf.mxu0
      %v1320 = vadd.f32 %v1217, %v1319
      %v1321 = vpop.f32.mrf.mxu0
      %v1322 = vadd.f32 %v1219, %v1321
      %v1323 = vpop.f32.mrf.mxu0
      %v1324 = vadd.f32 %v1221, %v1323
      %v1325 = vpop.f32.mrf.mxu0
      %v1326 = vadd.f32 %v1223, %v1325
      %1327 = vmatprep.mubr.bf16.mxu0 %v595
      %1328 = vmatmul.mubr.bf16.gmra.mxu0 %v594
      %v1329 = vpop.f32.mrf.mxu0
      %v1330 = vadd.f32 %v1227, %v1329
      %v1331 = vpop.f32.mrf.mxu0
      %v1332 = vadd.f32 %v1229, %v1331
      %v1333 = vpop.f32.mrf.mxu0
      %v1334 = vadd.f32 %v1231, %v1333
      %v1335 = vpop.f32.mrf.mxu0
      %v1336 = vadd.f32 %v1233, %v1335
      %1337 = vmatprep.mubr.bf16.mxu0 %v606
      %1338 = vmatmul.mubr.bf16.gmra.mxu0 %v605
      %v1339 = vpop.f32.mrf.mxu0
      %v1340 = vadd.f32 %v1237, %v1339
      %v1341 = vpop.f32.mrf.mxu0
      %v1342 = vadd.f32 %v1239, %v1341
      %v1343 = vpop.f32.mrf.mxu0
      %v1344 = vadd.f32 %v1241, %v1343
      %v1345 = vpop.f32.mrf.mxu0
      %v1346 = vadd.f32 %v1243, %v1345
      %1347 = vmatprep.mubr.bf16.mxu0 %v617
      %1348 = vmatmul.mubr.bf16.gmra.mxu0 %v616
      %v1349 = vpop.f32.mrf.mxu0
      %v1350 = vadd.f32 %v1247, %v1349
      %v1351 = vpop.f32.mrf.mxu0
      %v1352 = vadd.f32 %v1249, %v1351
      %v1353 = vpop.f32.mrf.mxu0
      %v1354 = vadd.f32 %v1251, %v1353
      %v1355 = vpop.f32.mrf.mxu0
      %v1356 = vadd.f32 %v1253, %v1355
      %1357 = vmatprep.mubr.bf16.mxu0 %v628
      %1358 = vmatmul.mubr.bf16.gmra.mxu0 %v627
      %v1359 = vpop.f32.mrf.mxu0
      %v1360 = vadd.f32 %v1257, %v1359
      %v1361 = vpop.f32.mrf.mxu0
      %v1362 = vadd.f32 %v1259, %v1361
      %v1363 = vpop.f32.mrf.mxu0
      %v1364 = vadd.f32 %v1261, %v1363
      %v1365 = vpop.f32.mrf.mxu0
      %v1366 = vadd.f32 %v1263, %v1365
      %1367 = vdwg.mxu0
      %1368 = vmatprep.subr.bf16.mxu0 %v1051
      %1369 = vmatpush1.bf16.msra.mxu0 %v1050
      %1370 = vmatprep.subr.bf16.mxu0 %v1049
      %1371 = vmatpush1.bf16.msra.mxu0 %v1048
      %1372 = vmatprep.subr.bf16.mxu0 %v1047
      %1373 = vmatpush1.bf16.msra.mxu0 %v1046
      %1374 = vmatprep.subr.bf16.mxu0 %v1045
      %1375 = vmatpush1.bf16.msra.mxu0 %v1044
      %1376 = vmatprep.subr.bf16.mxu0 %v1043
      %1377 = vmatpush1.bf16.msra.mxu0 %v1042
      %1378 = vmatprep.subr.bf16.mxu0 %v1041
      %1379 = vmatpush1.bf16.msra.mxu0 %v1040
      %1380 = vmatprep.subr.bf16.mxu0 %v1039
      %1381 = vmatpush1.bf16.msra.mxu0 %v1038
      %1382 = vmatprep.subr.bf16.mxu0 %v1037
      %1383 = vmatpush1.bf16.msra.mxu0 %v1036
      %1384 = vmatprep.subr.bf16.mxu0 %v1067
      %1385 = vmatpush2.bf16.msra.mxu0 %v1066
      %1386 = vmatprep.subr.bf16.mxu0 %v1065
      %1387 = vmatpush2.bf16.msra.mxu0 %v1064
      %1388 = vmatprep.subr.bf16.mxu0 %v1063
      %1389 = vmatpush2.bf16.msra.mxu0 %v1062
      %1390 = vmatprep.subr.bf16.mxu0 %v1061
      %1391 = vmatpush2.bf16.msra.mxu0 %v1060
      %1392 = vmatprep.subr.bf16.mxu0 %v1059
      %1393 = vmatpush2.bf16.msra.mxu0 %v1058
      %1394 = vmatprep.subr.bf16.mxu0 %v1057
      %1395 = vmatpush2.bf16.msra.mxu0 %v1056
      %1396 = vmatprep.subr.bf16.mxu0 %v1055
      %1397 = vmatpush2.bf16.msra.mxu0 %v1054
      %1398 = vmatprep.subr.bf16.mxu0 %v1053
      %1399 = vmatpush2.bf16.msra.mxu0 %v1052
      %1400 = vmatprep.mubr.bf16.mxu0 %v564
      %1401 = vmatmul.mubr.bf16.gmra.mxu0 %v563
      %v1402 = vpop.f32.mrf.mxu0
      %v1403 = vadd.f32 %v1300, %v1402
      %v1404 = vpop.f32.mrf.mxu0
      %v1405 = vadd.f32 %v1302, %v1404
      %v1406 = vpop.f32.mrf.mxu0
      %v1407 = vadd.f32 %v1304, %v1406
      %v1408 = vpop.f32.mrf.mxu0
      %v1409 = vadd.f32 %v1306, %v1408
      %1410 = vmatprep.mubr.bf16.mxu0 %v575
      %1411 = vmatmul.mubr.bf16.gmra.mxu0 %v574
      %v1412 = vpop.f32.mrf.mxu0
      %v1413 = vadd.f32 %v1310, %v1412
      %v1414 = vpop.f32.mrf.mxu0
      %v1415 = vadd.f32 %v1312, %v1414
      %v1416 = vpop.f32.mrf.mxu0
      %v1417 = vadd.f32 %v1314, %v1416
      %v1418 = vpop.f32.mrf.mxu0
      %v1419 = vadd.f32 %v1316, %v1418
      %1420 = vmatprep.mubr.bf16.mxu0 %v586
      %1421 = vmatmul.mubr.bf16.gmra.mxu0 %v585
      %v1422 = vpop.f32.mrf.mxu0
      %v1423 = vadd.f32 %v1320, %v1422
      %v1424 = vpop.f32.mrf.mxu0
      %v1425 = vadd.f32 %v1322, %v1424
      %v1426 = vpop.f32.mrf.mxu0
      %v1427 = vadd.f32 %v1324, %v1426
      %v1428 = vpop.f32.mrf.mxu0
      %v1429 = vadd.f32 %v1326, %v1428
      %1430 = vmatprep.mubr.bf16.mxu0 %v597
      %1431 = vmatmul.mubr.bf16.gmra.mxu0 %v596
      %v1432 = vpop.f32.mrf.mxu0
      %v1433 = vadd.f32 %v1330, %v1432
      %v1434 = vpop.f32.mrf.mxu0
      %v1435 = vadd.f32 %v1332, %v1434
      %v1436 = vpop.f32.mrf.mxu0
      %v1437 = vadd.f32 %v1334, %v1436
      %v1438 = vpop.f32.mrf.mxu0
      %v1439 = vadd.f32 %v1336, %v1438
      %1440 = vmatprep.mubr.bf16.mxu0 %v608
      %1441 = vmatmul.mubr.bf16.gmra.mxu0 %v607
      %v1442 = vpop.f32.mrf.mxu0
      %v1443 = vadd.f32 %v1340, %v1442
      %v1444 = vpop.f32.mrf.mxu0
      %v1445 = vadd.f32 %v1342, %v1444
      %v1446 = vpop.f32.mrf.mxu0
      %v1447 = vadd.f32 %v1344, %v1446
      %v1448 = vpop.f32.mrf.mxu0
      %v1449 = vadd.f32 %v1346, %v1448
      %1450 = vmatprep.mubr.bf16.mxu0 %v619
      %1451 = vmatmul.mubr.bf16.gmra.mxu0 %v618
      %v1452 = vpop.f32.mrf.mxu0
      %v1453 = vadd.f32 %v1350, %v1452
      %v1454 = vpop.f32.mrf.mxu0
      %v1455 = vadd.f32 %v1352, %v1454
      %v1456 = vpop.f32.mrf.mxu0
      %v1457 = vadd.f32 %v1354, %v1456
      %v1458 = vpop.f32.mrf.mxu0
      %v1459 = vadd.f32 %v1356, %v1458
      %1460 = vmatprep.mubr.bf16.mxu0 %v630
      %1461 = vmatmul.mubr.bf16.gmra.mxu0 %v629
      %v1462 = vpop.f32.mrf.mxu0
      %v1463 = vadd.f32 %v1360, %v1462
      %v1464 = vpop.f32.mrf.mxu0
      %v1465 = vadd.f32 %v1362, %v1464
      %v1466 = vpop.f32.mrf.mxu0
      %v1467 = vadd.f32 %v1364, %v1466
      %v1468 = vpop.f32.mrf.mxu0
      %v1469 = vadd.f32 %v1366, %v1468
      %1470 = vdwg.mxu0
      %1471 = vmatprep.subr.bf16.mxu0 %v1083
      %1472 = vmatpush1.bf16.msra.mxu0 %v1082
      %1473 = vmatprep.subr.bf16.mxu0 %v1081
      %1474 = vmatpush1.bf16.msra.mxu0 %v1080
      %1475 = vmatprep.subr.bf16.mxu0 %v1079
      %1476 = vmatpush1.bf16.msra.mxu0 %v1078
      %1477 = vmatprep.subr.bf16.mxu0 %v1077
      %1478 = vmatpush1.bf16.msra.mxu0 %v1076
      %1479 = vmatprep.subr.bf16.mxu0 %v1075
      %1480 = vmatpush1.bf16.msra.mxu0 %v1074
      %1481 = vmatprep.subr.bf16.mxu0 %v1073
      %1482 = vmatpush1.bf16.msra.mxu0 %v1072
      %1483 = vmatprep.subr.bf16.mxu0 %v1071
      %1484 = vmatpush1.bf16.msra.mxu0 %v1070
      %1485 = vmatprep.subr.bf16.mxu0 %v1069
      %1486 = vmatpush1.bf16.msra.mxu0 %v1068
      %1487 = vmatprep.subr.bf16.mxu0 %v1099
      %1488 = vmatpush2.bf16.msra.mxu0 %v1098
      %1489 = vmatprep.subr.bf16.mxu0 %v1097
      %1490 = vmatpush2.bf16.msra.mxu0 %v1096
      %1491 = vmatprep.subr.bf16.mxu0 %v1095
      %1492 = vmatpush2.bf16.msra.mxu0 %v1094
      %1493 = vmatprep.subr.bf16.mxu0 %v1093
      %1494 = vmatpush2.bf16.msra.mxu0 %v1092
      %1495 = vmatprep.subr.bf16.mxu0 %v1091
      %1496 = vmatpush2.bf16.msra.mxu0 %v1090
      %1497 = vmatprep.subr.bf16.mxu0 %v1089
      %1498 = vmatpush2.bf16.msra.mxu0 %v1088
      %1499 = vmatprep.subr.bf16.mxu0 %v1087
      %1500 = vmatpush2.bf16.msra.mxu0 %v1086
      %1501 = vmatprep.subr.bf16.mxu0 %v1085
      %1502 = vmatpush2.bf16.msra.mxu0 %v1084
      %1503 = vmatprep.mubr.bf16.mxu0 %v566
      %1504 = vmatmul.mubr.bf16.gmra.mxu0 %v565
      %v1505 = vpop.f32.mrf.mxu0
      %v1506 = vadd.f32 %v1403, %v1505
      %v1507 = vpop.f32.mrf.mxu0
      %v1508 = vadd.f32 %v1405, %v1507
      %v1509 = vpop.f32.mrf.mxu0
      %v1510 = vadd.f32 %v1407, %v1509
      %v1511 = vpop.f32.mrf.mxu0
      %v1512 = vadd.f32 %v1409, %v1511
      %1513 = vmatprep.mubr.bf16.mxu0 %v577
      %1514 = vmatmul.mubr.bf16.gmra.mxu0 %v576
      %v1515 = vpop.f32.mrf.mxu0
      %v1516 = vadd.f32 %v1413, %v1515
      %v1517 = vpop.f32.mrf.mxu0
      %v1518 = vadd.f32 %v1415, %v1517
      %v1519 = vpop.f32.mrf.mxu0
      %v1520 = vadd.f32 %v1417, %v1519
      %v1521 = vpop.f32.mrf.mxu0
      %v1522 = vadd.f32 %v1419, %v1521
      %1523 = vmatprep.mubr.bf16.mxu0 %v588
      %1524 = vmatmul.mubr.bf16.gmra.mxu0 %v587
      %v1525 = vpop.f32.mrf.mxu0
      %v1526 = vadd.f32 %v1423, %v1525
      %v1527 = vpop.f32.mrf.mxu0
      %v1528 = vadd.f32 %v1425, %v1527
      %v1529 = vpop.f32.mrf.mxu0
      %v1530 = vadd.f32 %v1427, %v1529
      %v1531 = vpop.f32.mrf.mxu0
      %v1532 = vadd.f32 %v1429, %v1531
      %1533 = vmatprep.mubr.bf16.mxu0 %v599
      %1534 = vmatmul.mubr.bf16.gmra.mxu0 %v598
      %v1535 = vpop.f32.mrf.mxu0
      %v1536 = vadd.f32 %v1433, %v1535
      %v1537 = vpop.f32.mrf.mxu0
      %v1538 = vadd.f32 %v1435, %v1537
      %v1539 = vpop.f32.mrf.mxu0
      %v1540 = vadd.f32 %v1437, %v1539
      %v1541 = vpop.f32.mrf.mxu0
      %v1542 = vadd.f32 %v1439, %v1541
      %1543 = vmatprep.mubr.bf16.mxu0 %v610
      %1544 = vmatmul.mubr.bf16.gmra.mxu0 %v609
      %v1545 = vpop.f32.mrf.mxu0
      %v1546 = vadd.f32 %v1443, %v1545
      %v1547 = vpop.f32.mrf.mxu0
      %v1548 = vadd.f32 %v1445, %v1547
      %v1549 = vpop.f32.mrf.mxu0
      %v1550 = vadd.f32 %v1447, %v1549
      %v1551 = vpop.f32.mrf.mxu0
      %v1552 = vadd.f32 %v1449, %v1551
      %1553 = vmatprep.mubr.bf16.mxu0 %v621
      %1554 = vmatmul.mubr.bf16.gmra.mxu0 %v620
      %v1555 = vpop.f32.mrf.mxu0
      %v1556 = vadd.f32 %v1453, %v1555
      %v1557 = vpop.f32.mrf.mxu0
      %v1558 = vadd.f32 %v1455, %v1557
      %v1559 = vpop.f32.mrf.mxu0
      %v1560 = vadd.f32 %v1457, %v1559
      %v1561 = vpop.f32.mrf.mxu0
      %v1562 = vadd.f32 %v1459, %v1561
      %1563 = vmatprep.mubr.bf16.mxu0 %v632
      %1564 = vmatmul.mubr.bf16.gmra.mxu0 %v631
      %v1565 = vpop.f32.mrf.mxu0
      %v1566 = vadd.f32 %v1463, %v1565
      %v1567 = vpop.f32.mrf.mxu0
      %v1568 = vadd.f32 %v1465, %v1567
      %v1569 = vpop.f32.mrf.mxu0
      %v1570 = vadd.f32 %v1467, %v1569
      %v1571 = vpop.f32.mrf.mxu0
      %v1572 = vadd.f32 %v1469, %v1571
      %1573 = vdwg.mxu0
      %1574 = vmatprep.subr.bf16.mxu0 %v1115
      %1575 = vmatpush1.bf16.msra.mxu0 %v1114
      %1576 = vmatprep.subr.bf16.mxu0 %v1113
      %1577 = vmatpush1.bf16.msra.mxu0 %v1112
      %1578 = vmatprep.subr.bf16.mxu0 %v1111
      %1579 = vmatpush1.bf16.msra.mxu0 %v1110
      %1580 = vmatprep.subr.bf16.mxu0 %v1109
      %1581 = vmatpush1.bf16.msra.mxu0 %v1108
      %1582 = vmatprep.subr.bf16.mxu0 %v1107
      %1583 = vmatpush1.bf16.msra.mxu0 %v1106
      %1584 = vmatprep.subr.bf16.mxu0 %v1105
      %1585 = vmatpush1.bf16.msra.mxu0 %v1104
      %1586 = vmatprep.subr.bf16.mxu0 %v1103
      %1587 = vmatpush1.bf16.msra.mxu0 %v1102
      %1588 = vmatprep.subr.bf16.mxu0 %v1101
      %1589 = vmatpush1.bf16.msra.mxu0 %v1100
      %1590 = vmatprep.subr.bf16.mxu0 %v1131
      %1591 = vmatpush2.bf16.msra.mxu0 %v1130
      %1592 = vmatprep.subr.bf16.mxu0 %v1129
      %1593 = vmatpush2.bf16.msra.mxu0 %v1128
      %1594 = vmatprep.subr.bf16.mxu0 %v1127
      %1595 = vmatpush2.bf16.msra.mxu0 %v1126
      %1596 = vmatprep.subr.bf16.mxu0 %v1125
      %1597 = vmatpush2.bf16.msra.mxu0 %v1124
      %1598 = vmatprep.subr.bf16.mxu0 %v1123
      %1599 = vmatpush2.bf16.msra.mxu0 %v1122
      %1600 = vmatprep.subr.bf16.mxu0 %v1121
      %1601 = vmatpush2.bf16.msra.mxu0 %v1120
      %1602 = vmatprep.subr.bf16.mxu0 %v1119
      %1603 = vmatpush2.bf16.msra.mxu0 %v1118
      %1604 = vmatprep.subr.bf16.mxu0 %v1117
      %1605 = vmatpush2.bf16.msra.mxu0 %v1116
      %1606 = vmatprep.mubr.bf16.mxu0 %v568
      %1607 = vmatmul.mubr.bf16.gmra.mxu0 %v567
      %v1608 = vpop.f32.mrf.mxu0
      %v1609 = vadd.f32 %v1506, %v1608
      %v1610 = vpop.f32.mrf.mxu0
      %v1611 = vadd.f32 %v1508, %v1610
      %v1612 = vpop.f32.mrf.mxu0
      %v1613 = vadd.f32 %v1510, %v1612
      %v1614 = vpop.f32.mrf.mxu0
      %v1615 = vadd.f32 %v1512, %v1614
      %1616 = vmatprep.mubr.bf16.mxu0 %v579
      %1617 = vmatmul.mubr.bf16.gmra.mxu0 %v578
      %v1618 = vpop.f32.mrf.mxu0
      %v1619 = vadd.f32 %v1516, %v1618
      %v1620 = vpop.f32.mrf.mxu0
      %v1621 = vadd.f32 %v1518, %v1620
      %v1622 = vpop.f32.mrf.mxu0
      %v1623 = vadd.f32 %v1520, %v1622
      %v1624 = vpop.f32.mrf.mxu0
      %v1625 = vadd.f32 %v1522, %v1624
      %1626 = vmatprep.mubr.bf16.mxu0 %v590
      %1627 = vmatmul.mubr.bf16.gmra.mxu0 %v589
      %v1628 = vpop.f32.mrf.mxu0
      %v1629 = vadd.f32 %v1526, %v1628
      %v1630 = vpop.f32.mrf.mxu0
      %v1631 = vadd.f32 %v1528, %v1630
      %v1632 = vpop.f32.mrf.mxu0
      %v1633 = vadd.f32 %v1530, %v1632
      %v1634 = vpop.f32.mrf.mxu0
      %v1635 = vadd.f32 %v1532, %v1634
      %1636 = vmatprep.mubr.bf16.mxu0 %v601
      %1637 = vmatmul.mubr.bf16.gmra.mxu0 %v600
      %v1638 = vpop.f32.mrf.mxu0
      %v1639 = vadd.f32 %v1536, %v1638
      %v1640 = vpop.f32.mrf.mxu0
      %v1641 = vadd.f32 %v1538, %v1640
      %v1642 = vpop.f32.mrf.mxu0
      %v1643 = vadd.f32 %v1540, %v1642
      %v1644 = vpop.f32.mrf.mxu0
      %v1645 = vadd.f32 %v1542, %v1644
      %1646 = vmatprep.mubr.bf16.mxu0 %v612
      %1647 = vmatmul.mubr.bf16.gmra.mxu0 %v611
      %v1648 = vpop.f32.mrf.mxu0
      %v1649 = vadd.f32 %v1546, %v1648
      %v1650 = vpop.f32.mrf.mxu0
      %v1651 = vadd.f32 %v1548, %v1650
      %v1652 = vpop.f32.mrf.mxu0
      %v1653 = vadd.f32 %v1550, %v1652
      %v1654 = vpop.f32.mrf.mxu0
      %v1655 = vadd.f32 %v1552, %v1654
      %1656 = vmatprep.mubr.bf16.mxu0 %v623
      %1657 = vmatmul.mubr.bf16.gmra.mxu0 %v622
      %v1658 = vpop.f32.mrf.mxu0
      %v1659 = vadd.f32 %v1556, %v1658
      %v1660 = vpop.f32.mrf.mxu0
      %v1661 = vadd.f32 %v1558, %v1660
      %v1662 = vpop.f32.mrf.mxu0
      %v1663 = vadd.f32 %v1560, %v1662
      %v1664 = vpop.f32.mrf.mxu0
      %v1665 = vadd.f32 %v1562, %v1664
      %1666 = vmatprep.mubr.bf16.mxu0 %v634
      %1667 = vmatmul.mubr.bf16.gmra.mxu0 %v633
      %v1668 = vpop.f32.mrf.mxu0
      %v1669 = vadd.f32 %v1566, %v1668
      %v1670 = vpop.f32.mrf.mxu0
      %v1671 = vadd.f32 %v1568, %v1670
      %v1672 = vpop.f32.mrf.mxu0
      %v1673 = vadd.f32 %v1570, %v1672
      %v1674 = vpop.f32.mrf.mxu0
      %v1675 = vadd.f32 %v1572, %v1674
      %1676 = vdwg.mxu0
      %1677 = vmatprep.subr.bf16.mxu0 0
      %1678 = vmatpush1.bf16.msra.mxu0 0
      %1679 = vmatprep.subr.bf16.mxu0 0
      %1680 = vmatpush1.bf16.msra.mxu0 0
      %1681 = vmatprep.subr.bf16.mxu0 0
      %1682 = vmatpush1.bf16.msra.mxu0 0
      %1683 = vmatprep.subr.bf16.mxu0 0
      %1684 = vmatpush1.bf16.msra.mxu0 0
      %1685 = vmatprep.subr.bf16.mxu0 %v1139
      %1686 = vmatpush1.bf16.msra.mxu0 %v1138
      %1687 = vmatprep.subr.bf16.mxu0 %v1137
      %1688 = vmatpush1.bf16.msra.mxu0 %v1136
      %1689 = vmatprep.subr.bf16.mxu0 %v1135
      %1690 = vmatpush1.bf16.msra.mxu0 %v1134
      %1691 = vmatprep.subr.bf16.mxu0 %v1133
      %1692 = vmatpush1.bf16.msra.mxu0 %v1132
      %1693 = vmatprep.subr.bf16.mxu0 0
      %1694 = vmatpush2.bf16.msra.mxu0 0
      %1695 = vmatprep.subr.bf16.mxu0 0
      %1696 = vmatpush2.bf16.msra.mxu0 0
      %1697 = vmatprep.subr.bf16.mxu0 0
      %1698 = vmatpush2.bf16.msra.mxu0 0
      %1699 = vmatprep.subr.bf16.mxu0 0
      %1700 = vmatpush2.bf16.msra.mxu0 0
      %1701 = vmatprep.subr.bf16.mxu0 0
      %1702 = vmatpush2.bf16.msra.mxu0 0
      %1703 = vmatprep.subr.bf16.mxu0 0
      %1704 = vmatpush2.bf16.msra.mxu0 0
      %1705 = vmatprep.subr.bf16.mxu0 0
      %1706 = vmatpush2.bf16.msra.mxu0 0
      %1707 = vmatprep.subr.bf16.mxu0 0
      %1708 = vmatpush2.bf16.msra.mxu0 0
      %1709 = vmatprep.mubr.bf16.mxu0 0
      %1710 = vmatmul.mubr.bf16.gmra.mxu0 %v1142
      %v1711 = vpop.f32.mrf.mxu0
      %v1712 = vadd.f32 %v1609, %v1711
      %v1713 = vpop.f32.mrf.mxu0
      %v1714 = vadd.f32 %v1611, %v1713
      %v1715 = vpop.f32.mrf.mxu0
      %v1716 = vadd.f32 %v1613, %v1715
      %v1717 = vpop.f32.mrf.mxu0
      %v1718 = vadd.f32 %v1615, %v1717
      %1719 = vmatprep.mubr.bf16.mxu0 0
      %1720 = vmatmul.mubr.bf16.gmra.mxu0 %v1145
      %v1721 = vpop.f32.mrf.mxu0
      %v1722 = vadd.f32 %v1619, %v1721
      %v1723 = vpop.f32.mrf.mxu0
      %v1724 = vadd.f32 %v1621, %v1723
      %v1725 = vpop.f32.mrf.mxu0
      %v1726 = vadd.f32 %v1623, %v1725
      %v1727 = vpop.f32.mrf.mxu0
      %v1728 = vadd.f32 %v1625, %v1727
      %1729 = vmatprep.mubr.bf16.mxu0 0
      %1730 = vmatmul.mubr.bf16.gmra.mxu0 %v1148
      %v1731 = vpop.f32.mrf.mxu0
      %v1732 = vadd.f32 %v1629, %v1731
      %v1733 = vpop.f32.mrf.mxu0
      %v1734 = vadd.f32 %v1631, %v1733
      %v1735 = vpop.f32.mrf.mxu0
      %v1736 = vadd.f32 %v1633, %v1735
      %v1737 = vpop.f32.mrf.mxu0
      %v1738 = vadd.f32 %v1635, %v1737
      %1739 = vmatprep.mubr.bf16.mxu0 0
      %1740 = vmatmul.mubr.bf16.gmra.mxu0 %v1151
      %v1741 = vpop.f32.mrf.mxu0
      %v1742 = vadd.f32 %v1639, %v1741
      %v1743 = vpop.f32.mrf.mxu0
      %v1744 = vadd.f32 %v1641, %v1743
      %v1745 = vpop.f32.mrf.mxu0
      %v1746 = vadd.f32 %v1643, %v1745
      %v1747 = vpop.f32.mrf.mxu0
      %v1748 = vadd.f32 %v1645, %v1747
      %1749 = vmatprep.mubr.bf16.mxu0 0
      %1750 = vmatmul.mubr.bf16.gmra.mxu0 %v1154
      %v1751 = vpop.f32.mrf.mxu0
      %v1752 = vadd.f32 %v1649, %v1751
      %v1753 = vpop.f32.mrf.mxu0
      %v1754 = vadd.f32 %v1651, %v1753
      %v1755 = vpop.f32.mrf.mxu0
      %v1756 = vadd.f32 %v1653, %v1755
      %v1757 = vpop.f32.mrf.mxu0
      %v1758 = vadd.f32 %v1655, %v1757
      %1759 = vmatprep.mubr.bf16.mxu0 0
      %1760 = vmatmul.mubr.bf16.gmra.mxu0 %v1157
      %v1761 = vpop.f32.mrf.mxu0
      %v1762 = vadd.f32 %v1659, %v1761
      %v1763 = vpop.f32.mrf.mxu0
      %v1764 = vadd.f32 %v1661, %v1763
      %v1765 = vpop.f32.mrf.mxu0
      %v1766 = vadd.f32 %v1663, %v1765
      %v1767 = vpop.f32.mrf.mxu0
      %v1768 = vadd.f32 %v1665, %v1767
      %1769 = vmatprep.mubr.bf16.mxu0 0
      %1770 = vmatmul.mubr.bf16.gmra.mxu0 %v1160
      %v1771 = vpop.f32.mrf.mxu0
      %v1772 = vadd.f32 %v1669, %v1771
      %v1773 = vpop.f32.mrf.mxu0
      %v1774 = vadd.f32 %v1671, %v1773
      %v1775 = vpop.f32.mrf.mxu0
      %v1776 = vadd.f32 %v1673, %v1775
      %v1777 = vpop.f32.mrf.mxu0
      %v1778 = vadd.f32 %v1675, %v1777
      %1779 = vdwg.mxu0
      %1780 = vst [vmem:[%s177] sm:$0xff] %v1712
      %vm1781 = vcmask 556032
      %1782 = vst.msk [vmem:[%s177 + $0x8] sm:$0xff] %vm1781, %v1714
      %1783 = vst [vmem:[%s177 + $0x10] sm:$0xff] %v1716
      %1784 = vst.msk [vmem:[%s177 + $0x18] sm:$0xff] %vm1781, %v1718
      %1785 = vst [vmem:[%s177 + $0x20] sm:$0xff] %v1722
      %1786 = vst.msk [vmem:[%s177 + $0x28] sm:$0xff] %vm1781, %v1724
      %1787 = vst [vmem:[%s177 + $0x30] sm:$0xff] %v1726
      %1788 = vst.msk [vmem:[%s177 + $0x38] sm:$0xff] %vm1781, %v1728
      %1789 = vst [vmem:[%s177 + $0x40] sm:$0xff] %v1732
      %1790 = vst.msk [vmem:[%s177 + $0x48] sm:$0xff] %vm1781, %v1734
      %1791 = vst [vmem:[%s177 + $0x50] sm:$0xff] %v1736
      %1792 = vst.msk [vmem:[%s177 + $0x58] sm:$0xff] %vm1781, %v1738
      %1793 = vst [vmem:[%s177 + $0x60] sm:$0xff] %v1742
      %1794 = vst.msk [vmem:[%s177 + $0x68] sm:$0xff] %vm1781, %v1744
      %1795 = vst [vmem:[%s177 + $0x70] sm:$0xff] %v1746
      %1796 = vst.msk [vmem:[%s177 + $0x78] sm:$0xff] %vm1781, %v1748
      %1797 = vst [vmem:[%s177 + $0x80] sm:$0xff] %v1752
      %1798 = vst.msk [vmem:[%s177 + $0x88] sm:$0xff] %vm1781, %v1754
      %1799 = vst [vmem:[%s177 + $0x90] sm:$0xff] %v1756
      %1800 = vst.msk [vmem:[%s177 + $0x98] sm:$0xff] %vm1781, %v1758
      %1801 = vst [vmem:[%s177 + $0xa0] sm:$0xff] %v1762
      %1802 = vst.msk [vmem:[%s177 + $0xa8] sm:$0xff] %vm1781, %v1764
      %1803 = vst [vmem:[%s177 + $0xb0] sm:$0xff] %v1766
      %1804 = vst.msk [vmem:[%s177 + $0xb8] sm:$0xff] %vm1781, %v1768
      %1805 = vst [vmem:[%s177 + $0xc0] sm:$0xff] %v1772
      %1806 = vst.msk [vmem:[%s177 + $0xc8] sm:$0xff] %vm1781, %v1774
      %1807 = vst [vmem:[%s177 + $0xd0] sm:$0xff] %v1776
      %1808 = vst.msk [vmem:[%s177 + $0xd8] sm:$0xff] %vm1781, %v1778
      %s1809 = smul.u32 14, %s14
      %p1810 = scmp.lt.s32.totalorder %s1809, 27
      %s1811 = scalar_select %p1810, %s1809, 27
      %s1812 = smul.addr %s1811, 2
      %s1813 = smul.addr %s1812, 8
      %s1814 = scalar_lea.vmem %s3, %s1813
      // Predicated region
      $region33: #{tpu_custom_call.1} parent=31 // pred_check
        %p1815 = pneg %p100
      $region34: #{tpu_custom_call.1} parent=31 // pred_check_branch
        %1817 = sbr.rel (%p1815) target = $region36
      $region35: #{tpu_custom_call.1} parent=31 // pred_region
        %s1818 = smul.u32 14, %s14
      $region36: #{tpu_custom_call.1} parent=31 // pred_fallthru
        _
    $region32: #{tpu_custom_call.1} parent=5 // pred_fallthru
      _
    %p1819 = scmp.le.s32.totalorder 2, %s9
    // Predicated region
    $region37: #{tpu_custom_call.1} parent=5 // pred_check
      %p1820 = pneg %p1819
    $region38: #{tpu_custom_call.1} parent=5 // pred_check_branch
      %1822 = sbr.rel (%p1820) target = $region40
    $region39: #{tpu_custom_call.1} parent=5 // pred_region
      %s1823 = ssub.s32 %s9, 2
      // Predicated region
      $region41: #{tpu_custom_call.1} parent=39 // pred_check
        %p1824 = pneg %p106
      $region42: #{tpu_custom_call.1} parent=39 // pred_check_branch
        %1826 = sbr.rel (%p1824) target = $region44
      $region43: #{tpu_custom_call.1} parent=39 // pred_region
        %s1827 = smul.u32 14, %s15
        %p1828 = scmp.lt.s32.totalorder %s1827, 27
        %s1829 = scalar_select %p1828, %s1827, 27
        %s1830 = smul.addr %s1829, 2
        %s1831 = smul.addr %s1830, 8
        %s1832 = scalar_lea.vmem %s3, %s1831
      $region44: #{tpu_custom_call.1} parent=39 // pred_fallthru
        _
    $region40: #{tpu_custom_call.1} parent=5 // pred_fallthru
      _
  $region6: #{tpu_custom_call.1} parent=0 // loop_footer
    %s13 = sadd.s32 1, %s9
  $region7: #{tpu_custom_call.1} parent=0 // loop_footer_branch
    %8 = sbr.rel target = $region3
  $region8: #{tpu_custom_call.1} parent=0 // loop_exit
    _

</llo_original>
